<compile_context>
chip_gen: v5e
topology: v5e:2x2
jax: 0.10.0
libtpu: 0.0.40
codegen_flags: <defaults>
</compile_context>

<pallas_src>
import functools
import math

import jax
import jax.numpy as jnp
import numpy as np
from jax.experimental import pallas as pl
from jax.experimental.pallas import tpu as pltpu

BN_EPS = 1e-5
LEAKY_SLOPE = 0.2
VMEM_LIMIT = 32 * 1024 * 1024  # safe on v5e/v6e (128 MiB) and v7x (64 MiB)


def _cdiv(a, b):
    return -(-a // b)


def _round_up(v, m):
    return _cdiv(v, m) * m


def _choose_row_tiling(h_out, w_out, n_batch, target_lanes):
    """Pick (rows_per_tile TH, row_tile_count RT) for the compact output layout.

    Keeps TH*W_out a multiple of 128 whenever RT > 1 (dense lane stores), caps the
    static unroll of the in-kernel compaction loop, and tries to give the grid >= 2
    steps so both v7x TensorCores get work.
    """
    th_unit = 128 // math.gcd(w_out, 128)
    th = max(th_unit, (max(1, target_lanes // w_out) // th_unit) * th_unit)
    th = min(th, _round_up(64, th_unit))  # cap static unroll of the compaction loop
    if n_batch == 1 and h_out > th_unit:  # v7x: keep >= 2 row tiles per image
        th = min(th, _round_up(_cdiv(h_out, 2), th_unit))
    if th >= h_out:
        return h_out, 1
    return th, _cdiv(h_out, th)


@functools.partial(jax.jit,
                   static_argnames=("kh", "kw", "stride", "padding", "target_lanes"))
def conv_block_forward(x, weight, bias, gamma, beta, *,
                       kh, kw, stride=1, padding=1, target_lanes=2048):
    """x: (N, Cin, H, W); weight: (Cout, Cin, kh, kw); bias/gamma/beta: (Cout,)."""
    # `bias` is accepted for nn.Conv2d API parity but NOT added: training-mode
    # BatchNorm subtracts the per-channel batch mean, which cancels any per-channel
    # constant exactly.  Re-add it if switching to eval-mode BN / no normalization.
    del bias
    n, c_in, h, w = x.shape
    c_out = weight.shape[0]
    wp = w + 2 * padding                       # padded input width (wide-row stride)
    hp = h + 2 * padding
    h_out = (h + 2 * padding - kh) // stride + 1
    w_out = (w + 2 * padding - kw) // stride + 1

    th, rt_total = _choose_row_tiling(h_out, w_out, n, target_lanes)
    thw = th * w_out                           # compact lanes per tile
    tlw = th * wp                              # wide (gap-including) lanes per tile
    o_max = (kh - 1) * wp + (kw - 1)           # largest tap offset
    slab = _round_up(stride * tlw + o_max + 1, 128)   # input span one row-tile needs

    # ---- input prep: pad spatially, flatten, cut per-row-tile slabs (with halo) ----
    xp = jnp.pad(x, ((0, 0), (0, 0), (padding, padding), (padding, padding)))
    x_flat = xp.reshape(n, c_in, hp * wp).astype(jnp.bfloat16)
    need = stride * (rt_total - 1) * tlw + slab
    if need > hp * wp:
        x_flat = jnp.pad(x_flat, ((0, 0), (0, 0), (0, need - hp * wp)))
    if rt_total == 1:
        x_slabs = x_flat[:, None]                                    # (N, 1, Cin, slab)
    else:
        x_slabs = jnp.stack(
            [x_flat[:, :, rt * stride * tlw: rt * stride * tlw + slab]
             for rt in range(rt_total)], axis=1)                     # (N, RT, Cin, slab)

    # weights per tap: (KH*KW, Cout, Cin) bf16, tap index = i*KW + j
    w_taps = (weight.astype(jnp.bfloat16)
              .transpose(2, 3, 0, 1).reshape(kh * kw, c_out, c_in))

    mask_rows = (rt_total * th != h_out)       # padded rows exist -> mask the stats
    inv_count = 1.0 / float(n * h_out * w_out)
    k_dim = c_in * kh * kw

    # ---- pass 1: in-kernel im2col conv + compact bf16 y + per-tile BN partials ----
    def conv_stats_kernel(x_ref, w_ref, y_ref, sum_ref, sumsq_ref):
        acc = None
        for i in range(kh):
            for j in range(kw):
                off = i * wp + j
                if stride == 1:
                    xs = x_ref[0, 0, :, off:off + tlw]               # (Cin, TLW) bf16
                else:
                    # TODO(synk): lane-strided path is best-effort (untested here).
                    xs = x_ref[0, 0, :, pl.ds(off, tlw, stride=stride)]
                part = jnp.dot(w_ref[i * kw + j], xs,
                               preferred_element_type=jnp.float32)   # (Cout, TLW) f32
                acc = part if acc is None else acc + part
        # Compact: drop the (wp - w_out) gap columns at the end of every output row.
        rows = [acc[:, r * wp: r * wp + w_out] for r in range(th)]
        yc = rows[0] if th == 1 else jnp.concatenate(rows, axis=1)   # (Cout, THW) f32
        y_ref[0] = yc.astype(y_ref.dtype)                            # bf16 store
        if mask_rows:  # zero out rows past H_out (only the last row-tile has them)
            rt = pl.program_id(1)
            lane = jax.lax.broadcasted_iota(jnp.int32, (1, thw), 1)
            valid = jnp.clip(h_out - rt * th, 0, th) * w_out
            yc = jnp.where(lane < valid, yc, 0.0)
        sum_ref[0, 0] = jnp.sum(yc, axis=1, keepdims=True)
        sumsq_ref[0, 0] = jnp.sum(yc * yc, axis=1, keepdims=True)

    y_c, psum, psumsq = pl.pallas_call(
        conv_stats_kernel,
        out_shape=(
            jax.ShapeDtypeStruct((n, c_out, rt_total * thw), jnp.bfloat16),
            jax.ShapeDtypeStruct((n, rt_total, c_out, 1), jnp.float32),
            jax.ShapeDtypeStruct((n, rt_total, c_out, 1), jnp.float32),
        ),
        grid=(n, rt_total),
        in_specs=[
            pl.BlockSpec((1, 1, c_in, slab), lambda b, t: (b, t, 0, 0)),
            pl.BlockSpec((kh * kw, c_out, c_in), lambda b, t: (0, 0, 0)),
        ],
        out_specs=(
            pl.BlockSpec((1, c_out, thw), lambda b, t: (b, 0, t)),
            pl.BlockSpec((1, 1, c_out, 1), lambda b, t: (b, t, 0, 0)),
            pl.BlockSpec((1, 1, c_out, 1), lambda b, t: (b, t, 0, 0)),
        ),
        compiler_params=pltpu.CompilerParams(
            dimension_semantics=("parallel", "parallel"),
            vmem_limit_bytes=VMEM_LIMIT),
        cost_estimate=pl.CostEstimate(
            flops=2 * n * rt_total * tlw * k_dim * c_out,
            transcendentals=0,
            bytes_accessed=(n * rt_total * c_in * slab * 2
                            + kh * kw * c_out * c_in * 2
                            + n * rt_total * c_out * thw * 2
                            + 2 * n * rt_total * c_out * 4)),
    )(x_slabs, w_taps)

    # ---- pass 2: fold BN (from partial sums) + LeakyReLU on the compact layout ----
    def bn_act_kernel(y_ref, psum_ref, psumsq_ref, gam_ref, bet_ref, o_ref):
        total = jnp.sum(psum_ref[...], axis=(0, 1))        # (Cout, 1)
        total_sq = jnp.sum(psumsq_ref[...], axis=(0, 1))   # (Cout, 1)
        mean = total * inv_count
        var = jnp.maximum(total_sq * inv_count - mean * mean, 0.0)
        scale = gam_ref[...] * jax.lax.rsqrt(var + BN_EPS)
        shift = bet_ref[...] - mean * scale
        z = y_ref[0].astype(jnp.float32) * scale + shift   # f32 math (v5e-friendly)
        o_ref[0] = jnp.where(z > 0, z, LEAKY_SLOPE * z)

    z = pl.pallas_call(
        bn_act_kernel,
        out_shape=jax.ShapeDtypeStruct((n, c_out, rt_total * thw), jnp.float32),
        grid=(n, rt_total),
        in_specs=[
            pl.BlockSpec((1, c_out, thw), lambda b, t: (b, 0, t)),
            pl.BlockSpec((n, rt_total, c_out, 1), lambda b, t: (0, 0, 0, 0)),
            pl.BlockSpec((n, rt_total, c_out, 1), lambda b, t: (0, 0, 0, 0)),
            pl.BlockSpec((c_out, 1), lambda b, t: (0, 0)),
            pl.BlockSpec((c_out, 1), lambda b, t: (0, 0)),
        ],
        out_specs=pl.BlockSpec((1, c_out, thw), lambda b, t: (b, 0, t)),
        compiler_params=pltpu.CompilerParams(
            dimension_semantics=("parallel", "parallel"),
            vmem_limit_bytes=VMEM_LIMIT),
        cost_estimate=pl.CostEstimate(
            flops=4 * n * rt_total * c_out * thw,
            transcendentals=c_out,
            bytes_accessed=(n * rt_total * c_out * thw * (2 + 4)
                            + 2 * n * rt_total * c_out * 4 + 2 * c_out * 4)),
    )(y_c, psum, psumsq,
      gamma.astype(jnp.float32).reshape(c_out, 1),
      beta.astype(jnp.float32).reshape(c_out, 1))

    hw = h_out * w_out
    if rt_total * thw != hw:
        z = z[:, :, :hw]          # drop padded rows (only when H_out % TH != 0)
    return z.reshape(n, c_out, h_out, w_out)   # free reshape: already NC(HW) layout


def _reference(x, weight, bias, gamma, beta, stride, padding):
    """Pure-JAX f32 reference matching the PyTorch module forward (training BN)."""
    y = jax.lax.conv_general_dilated(
        x, weight, window_strides=(stride, stride),
        padding=[(padding, padding), (padding, padding)],
        dimension_numbers=("NCHW", "OIHW", "NCHW"))
    y = y + bias[None, :, None, None]
    mean = jnp.mean(y, axis=(0, 2, 3), keepdims=True)
    var = jnp.mean((y - mean) ** 2, axis=(0, 2, 3), keepdims=True)
    yh = (y - mean) * jax.lax.rsqrt(var + BN_EPS)
    zz = yh * gamma[None, :, None, None] + beta[None, :, None, None]
    return jnp.where(zz > 0, zz, LEAKY_SLOPE * zz)


if __name__ == "__main__":
    # ConvBlock(dict(in_channels=4, out_channels=8, kernel_size=3, stride=1, padding=1))
    N, C_IN, H, W = 2, 4, 16, 16
    C_OUT, KH, KW, STRIDE, PAD = 8, 3, 3, 1, 1

    key = jax.random.PRNGKey(0)
    kx, kw_, kb = jax.random.split(key, 3)

    x = jax.random.normal(kx, (N, C_IN, H, W), dtype=jnp.float32)

    fan_in = C_IN * KH * KW
    bound = 1.0 / math.sqrt(fan_in)
    weight = jax.random.uniform(kw_, (C_OUT, C_IN, KH, KW),
                                minval=-bound, maxval=bound, dtype=jnp.float32)
    bias = jax.random.uniform(kb, (C_OUT,), minval=-bound, maxval=bound,
                              dtype=jnp.float32)
    gamma = jnp.ones((C_OUT,), dtype=jnp.float32)   # BatchNorm2d weight init
    beta = jnp.zeros((C_OUT,), dtype=jnp.float32)   # BatchNorm2d bias init

    out = conv_block_forward(x, weight, bias, gamma, beta,
                             kh=KH, kw=KW, stride=STRIDE, padding=PAD)
    out = jax.block_until_ready(out)

    assert out.shape == (N, C_OUT, H, W), out.shape
    assert out.dtype == jnp.float32

    ref = _reference(x, weight, bias, gamma, beta, STRIDE, PAD)
    np.testing.assert_allclose(np.asarray(out), np.asarray(ref),
                               rtol=5e-2, atol=5e-2)
    print("KERNEL_OK")
</pallas_src>

<mosaic_0001>
module attributes {stable_mosaic.version = 11 : i64} {
  func.func @bn_act_kernel(%arg0: i32, %arg1: i32, %arg2: memref<1x8x256xbf16, #tpu.memory_space<vmem>>, %arg3: memref<2x1x8x1xf32, #tpu.memory_space<vmem>>, %arg4: memref<2x1x8x1xf32, #tpu.memory_space<vmem>>, %arg5: memref<8x1xf32, #tpu.memory_space<vmem>>, %arg6: memref<8x1xf32, #tpu.memory_space<vmem>>, %arg7: memref<1x8x256xf32, #tpu.memory_space<vmem>>) attributes {dimension_semantics = [#tpu.dimension_semantics<parallel>, #tpu.dimension_semantics<parallel>], iteration_bounds = array<i64: 2, 1>, scalar_prefetch = 0 : i64, scratch_operands = 0 : i64, tpu.core_type = #tpu.core_type<tc>, window_params = [{transform_indices = @transform_0, window_bounds = array<i64: 1, 8, 256>}, {pipeline_mode = #tpu.pipeline_mode<synchronous>, transform_indices = @transform_1, window_bounds = array<i64: 2, 1, 8, 1>}, {pipeline_mode = #tpu.pipeline_mode<synchronous>, transform_indices = @transform_2, window_bounds = array<i64: 2, 1, 8, 1>}, {pipeline_mode = #tpu.pipeline_mode<synchronous>, transform_indices = @transform_3, window_bounds = array<i64: 8, 1>}, {pipeline_mode = #tpu.pipeline_mode<synchronous>, transform_indices = @transform_4, window_bounds = array<i64: 8, 1>}, {transform_indices = @transform_5, window_bounds = array<i64: 1, 8, 256>}]} {
    %c0 = arith.constant 0 : index
    %c0_0 = arith.constant 0 : index
    %c0_1 = arith.constant 0 : index
    %c0_2 = arith.constant 0 : index
    %0 = vector.load %arg3[%c0, %c0_0, %c0_1, %c0_2] : memref<2x1x8x1xf32, #tpu.memory_space<vmem>>, vector<2x1x8x1xf32>
    %cst = arith.constant dense<0.000000e+00> : vector<8x1xf32>
    %1 = vector.multi_reduction <add>, %0, %cst [0, 1] : vector<2x1x8x1xf32> to vector<8x1xf32>
    %c0_3 = arith.constant 0 : index
    %c0_4 = arith.constant 0 : index
    %c0_5 = arith.constant 0 : index
    %c0_6 = arith.constant 0 : index
    %2 = vector.load %arg4[%c0_3, %c0_4, %c0_5, %c0_6] : memref<2x1x8x1xf32, #tpu.memory_space<vmem>>, vector<2x1x8x1xf32>
    %cst_7 = arith.constant dense<0.000000e+00> : vector<8x1xf32>
    %3 = vector.multi_reduction <add>, %2, %cst_7 [0, 1] : vector<2x1x8x1xf32> to vector<8x1xf32>
    %cst_8 = arith.constant 0.001953125 : f32
    %4 = vector.broadcast %cst_8 : f32 to vector<8x1xf32>
    %5 = arith.mulf %1, %4 : vector<8x1xf32>
    %cst_9 = arith.constant 0.001953125 : f32
    %6 = vector.broadcast %cst_9 : f32 to vector<8x1xf32>
    %7 = arith.mulf %3, %6 : vector<8x1xf32>
    %8 = arith.mulf %5, %5 : vector<8x1xf32>
    %9 = arith.subf %7, %8 : vector<8x1xf32>
    %cst_10 = arith.constant 0.000000e+00 : f32
    %10 = vector.broadcast %cst_10 : f32 to vector<8x1xf32>
    %11 = arith.maximumf %9, %10 : vector<8x1xf32>
    %c0_11 = arith.constant 0 : index
    %c0_12 = arith.constant 0 : index
    %12 = vector.load %arg5[%c0_11, %c0_12] : memref<8x1xf32, #tpu.memory_space<vmem>>, vector<8x1xf32>
    %cst_13 = arith.constant 9.99999974E-6 : f32
    %13 = vector.broadcast %cst_13 : f32 to vector<8x1xf32>
    %14 = arith.addf %11, %13 : vector<8x1xf32>
    %15 = math.rsqrt %14 : vector<8x1xf32>
    %16 = arith.mulf %12, %15 : vector<8x1xf32>
    %c0_14 = arith.constant 0 : index
    %c0_15 = arith.constant 0 : index
    %17 = vector.load %arg6[%c0_14, %c0_15] : memref<8x1xf32, #tpu.memory_space<vmem>>, vector<8x1xf32>
    %18 = arith.mulf %5, %16 : vector<8x1xf32>
    %19 = arith.subf %17, %18 : vector<8x1xf32>
    %c0_16 = arith.constant 0 : index
    %c0_17 = arith.constant 0 : index
    %c0_18 = arith.constant 0 : index
    %20 = vector.load %arg2[%c0_16, %c0_17, %c0_18] : memref<1x8x256xbf16, #tpu.memory_space<vmem>>, vector<1x8x256xbf16>
    %21 = vector.shape_cast %20 : vector<1x8x256xbf16> to vector<8x256xbf16>
    %22 = arith.extf %21 : vector<8x256xbf16> to vector<8x256xf32>
    %23 = vector.broadcast %16 : vector<8x1xf32> to vector<8x256xf32>
    %24 = arith.mulf %22, %23 : vector<8x256xf32>
    %25 = vector.broadcast %19 : vector<8x1xf32> to vector<8x256xf32>
    %26 = arith.addf %24, %25 : vector<8x256xf32>
    %cst_19 = arith.constant 0.000000e+00 : f32
    %27 = vector.broadcast %cst_19 : f32 to vector<8x256xf32>
    %28 = arith.cmpf ogt, %26, %27 : vector<8x256xf32>
    %cst_20 = arith.constant 2.000000e-01 : f32
    %29 = vector.broadcast %cst_20 : f32 to vector<8x256xf32>
    %30 = arith.mulf %29, %26 : vector<8x256xf32>
    %31 = arith.select %28, %26, %30 : vector<8x256xi1>, vector<8x256xf32>
    %c0_21 = arith.constant 0 : index
    %c0_22 = arith.constant 0 : index
    %c0_23 = arith.constant 0 : index
    %32 = vector.load %arg7[%c0_21, %c0_22, %c0_23] : memref<1x8x256xf32, #tpu.memory_space<vmem>>, vector<1x8x256xf32>
    %33 = vector.shape_cast %32 : vector<1x8x256xf32> to vector<8x256xf32>
    %34 = vector.shape_cast %31 : vector<8x256xf32> to vector<1x8x256xf32>
    tpu.vector_store %arg7[%c0_21, %c0_22, %c0_23], %34 {strides = array<i32>} : memref<1x8x256xf32, #tpu.memory_space<vmem>>, vector<1x8x256xf32>,
    return
  }
  func.func @transform_0(%arg0: i32, %arg1: i32) -> (i32, i32, i32) {
    %c0_i32 = arith.constant 0 : i32
    %c0_i32_0 = arith.constant 0 : i32
    return %arg0, %c0_i32, %arg1 : i32, i32, i32
  }
  func.func @transform_1(%arg0: i32, %arg1: i32) -> (i32, i32, i32, i32) {
    %c0_i32 = arith.constant 0 : i32
    %c0_i32_0 = arith.constant 0 : i32
    %c0_i32_1 = arith.constant 0 : i32
    %c0_i32_2 = arith.constant 0 : i32
    %c0_i32_3 = arith.constant 0 : i32
    return %c0_i32, %c0_i32_0, %c0_i32_1, %c0_i32_2 : i32, i32, i32, i32
  }
  func.func @transform_2(%arg0: i32, %arg1: i32) -> (i32, i32, i32, i32) {
    %c0_i32 = arith.constant 0 : i32
    %c0_i32_0 = arith.constant 0 : i32
    %c0_i32_1 = arith.constant 0 : i32
    %c0_i32_2 = arith.constant 0 : i32
    %c0_i32_3 = arith.constant 0 : i32
    return %c0_i32, %c0_i32_0, %c0_i32_1, %c0_i32_2 : i32, i32, i32, i32
  }
  func.func @transform_3(%arg0: i32, %arg1: i32) -> (i32, i32) {
    %c0_i32 = arith.constant 0 : i32
    %c0_i32_0 = arith.constant 0 : i32
    %c0_i32_1 = arith.constant 0 : i32
    return %c0_i32, %c0_i32_0 : i32, i32
  }
  func.func @transform_4(%arg0: i32, %arg1: i32) -> (i32, i32) {
    %c0_i32 = arith.constant 0 : i32
    %c0_i32_0 = arith.constant 0 : i32
    %c0_i32_1 = arith.constant 0 : i32
    return %c0_i32, %c0_i32_0 : i32, i32
  }
  func.func @transform_5(%arg0: i32, %arg1: i32) -> (i32, i32, i32) {
    %c0_i32 = arith.constant 0 : i32
    %c0_i32_0 = arith.constant 0 : i32
    return %arg0, %c0_i32, %arg1 : i32, i32, i32
  }
}

module attributes {stable_mosaic.version = 11 : i64} {
  func.func @conv_stats_kernel(%arg0: i32, %arg1: i32, %arg2: memref<1x1x4x384xbf16, #tpu.memory_space<vmem>>, %arg3: memref<9x8x4xbf16, #tpu.memory_space<vmem>>, %arg4: memref<1x8x256xbf16, #tpu.memory_space<vmem>>, %arg5: memref<1x1x8x1xf32, #tpu.memory_space<vmem>>, %arg6: memref<1x1x8x1xf32, #tpu.memory_space<vmem>>) attributes {dimension_semantics = [#tpu.dimension_semantics<parallel>, #tpu.dimension_semantics<parallel>], iteration_bounds = array<i64: 2, 1>, scalar_prefetch = 0 : i64, scratch_operands = 0 : i64, tpu.core_type = #tpu.core_type<tc>, window_params = [{transform_indices = @transform_0, window_bounds = array<i64: 1, 1, 4, 384>}, {pipeline_mode = #tpu.pipeline_mode<synchronous>, transform_indices = @transform_1, window_bounds = array<i64: 9, 8, 4>}, {transform_indices = @transform_2, window_bounds = array<i64: 1, 8, 256>}, {transform_indices = @transform_3, window_bounds = array<i64: 1, 1, 8, 1>}, {transform_indices = @transform_4, window_bounds = array<i64: 1, 1, 8, 1>}]} {
    %c0 = arith.constant 0 : index
    %c0_0 = arith.constant 0 : index
    %c0_1 = arith.constant 0 : index
    %c0_2 = arith.constant 0 : index
    %0 = vector.load %arg2[%c0, %c0_0, %c0_1, %c0_2] : memref<1x1x4x384xbf16, #tpu.memory_space<vmem>>, vector<1x1x4x288xbf16>
    %1 = vector.shape_cast %0 : vector<1x1x4x288xbf16> to vector<4x288xbf16>
    %c0_3 = arith.constant 0 : index
    %c0_4 = arith.constant 0 : index
    %c0_5 = arith.constant 0 : index
    %2 = vector.load %arg3[%c0_3, %c0_4, %c0_5] : memref<9x8x4xbf16, #tpu.memory_space<vmem>>, vector<1x8x4xbf16>
    %3 = vector.shape_cast %2 : vector<1x8x4xbf16> to vector<8x4xbf16>
    %cst = arith.constant dense<0.000000e+00> : vector<8x288xf32>
    %4 = tpu.matmul %3, %1, %cst {dimension_numbers = #tpu.dot_dimension_numbers<[1], [0], [0], [1], [0, 0, 1, 1], [], []>} : vector<8x4xbf16>, vector<4x288xbf16>, vector<8x288xf32> -> vector<8x288xf32>
    %c0_6 = arith.constant 0 : index
    %c0_7 = arith.constant 0 : index
    %c0_8 = arith.constant 0 : index
    %c1 = arith.constant 1 : index
    %5 = vector.load %arg2[%c0_6, %c0_7, %c0_8, %c1] : memref<1x1x4x384xbf16, #tpu.memory_space<vmem>>, vector<1x1x4x288xbf16>
    %6 = vector.shape_cast %5 : vector<1x1x4x288xbf16> to vector<4x288xbf16>
    %c1_9 = arith.constant 1 : index
    %c0_10 = arith.constant 0 : index
    %c0_11 = arith.constant 0 : index
    %7 = vector.load %arg3[%c1_9, %c0_10, %c0_11] : memref<9x8x4xbf16, #tpu.memory_space<vmem>>, vector<1x8x4xbf16>
    %8 = vector.shape_cast %7 : vector<1x8x4xbf16> to vector<8x4xbf16>
    %cst_12 = arith.constant dense<0.000000e+00> : vector<8x288xf32>
    %9 = tpu.matmul %8, %6, %cst_12 {dimension_numbers = #tpu.dot_dimension_numbers<[1], [0], [0], [1], [0, 0, 1, 1], [], []>} : vector<8x4xbf16>, vector<4x288xbf16>, vector<8x288xf32> -> vector<8x288xf32>
    %10 = arith.addf %4, %9 : vector<8x288xf32>
    %c0_13 = arith.constant 0 : index
    %c0_14 = arith.constant 0 : index
    %c0_15 = arith.constant 0 : index
    %c2 = arith.constant 2 : index
    %11 = vector.load %arg2[%c0_13, %c0_14, %c0_15, %c2] : memref<1x1x4x384xbf16, #tpu.memory_space<vmem>>, vector<1x1x4x288xbf16>
    %12 = vector.shape_cast %11 : vector<1x1x4x288xbf16> to vector<4x288xbf16>
    %c2_16 = arith.constant 2 : index
    %c0_17 = arith.constant 0 : index
    %c0_18 = arith.constant 0 : index
    %13 = vector.load %arg3[%c2_16, %c0_17, %c0_18] : memref<9x8x4xbf16, #tpu.memory_space<vmem>>, vector<1x8x4xbf16>
    %14 = vector.shape_cast %13 : vector<1x8x4xbf16> to vector<8x4xbf16>
    %cst_19 = arith.constant dense<0.000000e+00> : vector<8x288xf32>
    %15 = tpu.matmul %14, %12, %cst_19 {dimension_numbers = #tpu.dot_dimension_numbers<[1], [0], [0], [1], [0, 0, 1, 1], [], []>} : vector<8x4xbf16>, vector<4x288xbf16>, vector<8x288xf32> -> vector<8x288xf32>
    %16 = arith.addf %10, %15 : vector<8x288xf32>
    %c0_20 = arith.constant 0 : index
    %c0_21 = arith.constant 0 : index
    %c0_22 = arith.constant 0 : index
    %c18 = arith.constant 18 : index
    %17 = vector.load %arg2[%c0_20, %c0_21, %c0_22, %c18] : memref<1x1x4x384xbf16, #tpu.memory_space<vmem>>, vector<1x1x4x288xbf16>
    %18 = vector.shape_cast %17 : vector<1x1x4x288xbf16> to vector<4x288xbf16>
    %c3 = arith.constant 3 : index
    %c0_23 = arith.constant 0 : index
    %c0_24 = arith.constant 0 : index
    %19 = vector.load %arg3[%c3, %c0_23, %c0_24] : memref<9x8x4xbf16, #tpu.memory_space<vmem>>, vector<1x8x4xbf16>
    %20 = vector.shape_cast %19 : vector<1x8x4xbf16> to vector<8x4xbf16>
    %cst_25 = arith.constant dense<0.000000e+00> : vector<8x288xf32>
    %21 = tpu.matmul %20, %18, %cst_25 {dimension_numbers = #tpu.dot_dimension_numbers<[1], [0], [0], [1], [0, 0, 1, 1], [], []>} : vector<8x4xbf16>, vector<4x288xbf16>, vector<8x288xf32> -> vector<8x288xf32>
    %22 = arith.addf %16, %21 : vector<8x288xf32>
    %c0_26 = arith.constant 0 : index
    %c0_27 = arith.constant 0 : index
    %c0_28 = arith.constant 0 : index
    %c19 = arith.constant 19 : index
    %23 = vector.load %arg2[%c0_26, %c0_27, %c0_28, %c19] : memref<1x1x4x384xbf16, #tpu.memory_space<vmem>>, vector<1x1x4x288xbf16>
    %24 = vector.shape_cast %23 : vector<1x1x4x288xbf16> to vector<4x288xbf16>
    %c4 = arith.constant 4 : index
    %c0_29 = arith.constant 0 : index
    %c0_30 = arith.constant 0 : index
    %25 = vector.load %arg3[%c4, %c0_29, %c0_30] : memref<9x8x4xbf16, #tpu.memory_space<vmem>>, vector<1x8x4xbf16>
    %26 = vector.shape_cast %25 : vector<1x8x4xbf16> to vector<8x4xbf16>
    %cst_31 = arith.constant dense<0.000000e+00> : vector<8x288xf32>
    %27 = tpu.matmul %26, %24, %cst_31 {dimension_numbers = #tpu.dot_dimension_numbers<[1], [0], [0], [1], [0, 0, 1, 1], [], []>} : vector<8x4xbf16>, vector<4x288xbf16>, vector<8x288xf32> -> vector<8x288xf32>
    %28 = arith.addf %22, %27 : vector<8x288xf32>
    %c0_32 = arith.constant 0 : index
    %c0_33 = arith.constant 0 : index
    %c0_34 = arith.constant 0 : index
    %c20 = arith.constant 20 : index
    %29 = vector.load %arg2[%c0_32, %c0_33, %c0_34, %c20] : memref<1x1x4x384xbf16, #tpu.memory_space<vmem>>, vector<1x1x4x288xbf16>
    %30 = vector.shape_cast %29 : vector<1x1x4x288xbf16> to vector<4x288xbf16>
    %c5 = arith.constant 5 : index
    %c0_35 = arith.constant 0 : index
    %c0_36 = arith.constant 0 : index
    %31 = vector.load %arg3[%c5, %c0_35, %c0_36] : memref<9x8x4xbf16, #tpu.memory_space<vmem>>, vector<1x8x4xbf16>
    %32 = vector.shape_cast %31 : vector<1x8x4xbf16> to vector<8x4xbf16>
    %cst_37 = arith.constant dense<0.000000e+00> : vector<8x288xf32>
    %33 = tpu.matmul %32, %30, %cst_37 {dimension_numbers = #tpu.dot_dimension_numbers<[1], [0], [0], [1], [0, 0, 1, 1], [], []>} : vector<8x4xbf16>, vector<4x288xbf16>, vector<8x288xf32> -> vector<8x288xf32>
    %34 = arith.addf %28, %33 : vector<8x288xf32>
    %c0_38 = arith.constant 0 : index
    %c0_39 = arith.constant 0 : index
    %c0_40 = arith.constant 0 : index
    %c36 = arith.constant 36 : index
    %35 = vector.load %arg2[%c0_38, %c0_39, %c0_40, %c36] : memref<1x1x4x384xbf16, #tpu.memory_space<vmem>>, vector<1x1x4x288xbf16>
    %36 = vector.shape_cast %35 : vector<1x1x4x288xbf16> to vector<4x288xbf16>
    %c6 = arith.constant 6 : index
    %c0_41 = arith.constant 0 : index
    %c0_42 = arith.constant 0 : index
    %37 = vector.load %arg3[%c6, %c0_41, %c0_42] : memref<9x8x4xbf16, #tpu.memory_space<vmem>>, vector<1x8x4xbf16>
    %38 = vector.shape_cast %37 : vector<1x8x4xbf16> to vector<8x4xbf16>
    %cst_43 = arith.constant dense<0.000000e+00> : vector<8x288xf32>
    %39 = tpu.matmul %38, %36, %cst_43 {dimension_numbers = #tpu.dot_dimension_numbers<[1], [0], [0], [1], [0, 0, 1, 1], [], []>} : vector<8x4xbf16>, vector<4x288xbf16>, vector<8x288xf32> -> vector<8x288xf32>
    %40 = arith.addf %34, %39 : vector<8x288xf32>
    %c0_44 = arith.constant 0 : index
    %c0_45 = arith.constant 0 : index
    %c0_46 = arith.constant 0 : index
    %c37 = arith.constant 37 : index
    %41 = vector.load %arg2[%c0_44, %c0_45, %c0_46, %c37] : memref<1x1x4x384xbf16, #tpu.memory_space<vmem>>, vector<1x1x4x288xbf16>
    %42 = vector.shape_cast %41 : vector<1x1x4x288xbf16> to vector<4x288xbf16>
    %c7 = arith.constant 7 : index
    %c0_47 = arith.constant 0 : index
    %c0_48 = arith.constant 0 : index
    %43 = vector.load %arg3[%c7, %c0_47, %c0_48] : memref<9x8x4xbf16, #tpu.memory_space<vmem>>, vector<1x8x4xbf16>
    %44 = vector.shape_cast %43 : vector<1x8x4xbf16> to vector<8x4xbf16>
    %cst_49 = arith.constant dense<0.000000e+00> : vector<8x288xf32>
    %45 = tpu.matmul %44, %42, %cst_49 {dimension_numbers = #tpu.dot_dimension_numbers<[1], [0], [0], [1], [0, 0, 1, 1], [], []>} : vector<8x4xbf16>, vector<4x288xbf16>, vector<8x288xf32> -> vector<8x288xf32>
    %46 = arith.addf %40, %45 : vector<8x288xf32>
    %c0_50 = arith.constant 0 : index
    %c0_51 = arith.constant 0 : index
    %c0_52 = arith.constant 0 : index
    %c38 = arith.constant 38 : index
    %47 = vector.load %arg2[%c0_50, %c0_51, %c0_52, %c38] : memref<1x1x4x384xbf16, #tpu.memory_space<vmem>>, vector<1x1x4x288xbf16>
    %48 = vector.shape_cast %47 : vector<1x1x4x288xbf16> to vector<4x288xbf16>
    %c8 = arith.constant 8 : index
    %c0_53 = arith.constant 0 : index
    %c0_54 = arith.constant 0 : index
    %49 = vector.load %arg3[%c8, %c0_53, %c0_54] : memref<9x8x4xbf16, #tpu.memory_space<vmem>>, vector<1x8x4xbf16>
    %50 = vector.shape_cast %49 : vector<1x8x4xbf16> to vector<8x4xbf16>
    %cst_55 = arith.constant dense<0.000000e+00> : vector<8x288xf32>
    %51 = tpu.matmul %50, %48, %cst_55 {dimension_numbers = #tpu.dot_dimension_numbers<[1], [0], [0], [1], [0, 0, 1, 1], [], []>} : vector<8x4xbf16>, vector<4x288xbf16>, vector<8x288xf32> -> vector<8x288xf32>
    %52 = arith.addf %46, %51 : vector<8x288xf32>
    %53 = vector.extract_strided_slice %52 {offsets = [0, 0], sizes = [8, 16], strides = [1, 1]} : vector<8x288xf32> to vector<8x16xf32>
    %54 = vector.extract_strided_slice %52 {offsets = [0, 18], sizes = [8, 16], strides = [1, 1]} : vector<8x288xf32> to vector<8x16xf32>
    %55 = vector.extract_strided_slice %52 {offsets = [0, 36], sizes = [8, 16], strides = [1, 1]} : vector<8x288xf32> to vector<8x16xf32>
    %56 = vector.extract_strided_slice %52 {offsets = [0, 54], sizes = [8, 16], strides = [1, 1]} : vector<8x288xf32> to vector<8x16xf32>
    %57 = vector.extract_strided_slice %52 {offsets = [0, 72], sizes = [8, 16], strides = [1, 1]} : vector<8x288xf32> to vector<8x16xf32>
    %58 = vector.extract_strided_slice %52 {offsets = [0, 90], sizes = [8, 16], strides = [1, 1]} : vector<8x288xf32> to vector<8x16xf32>
    %59 = vector.extract_strided_slice %52 {offsets = [0, 108], sizes = [8, 16], strides = [1, 1]} : vector<8x288xf32> to vector<8x16xf32>
    %60 = vector.extract_strided_slice %52 {offsets = [0, 126], sizes = [8, 16], strides = [1, 1]} : vector<8x288xf32> to vector<8x16xf32>
    %61 = vector.extract_strided_slice %52 {offsets = [0, 144], sizes = [8, 16], strides = [1, 1]} : vector<8x288xf32> to vector<8x16xf32>
    %62 = vector.extract_strided_slice %52 {offsets = [0, 162], sizes = [8, 16], strides = [1, 1]} : vector<8x288xf32> to vector<8x16xf32>
    %63 = vector.extract_strided_slice %52 {offsets = [0, 180], sizes = [8, 16], strides = [1, 1]} : vector<8x288xf32> to vector<8x16xf32>
    %64 = vector.extract_strided_slice %52 {offsets = [0, 198], sizes = [8, 16], strides = [1, 1]} : vector<8x288xf32> to vector<8x16xf32>
    %65 = vector.extract_strided_slice %52 {offsets = [0, 216], sizes = [8, 16], strides = [1, 1]} : vector<8x288xf32> to vector<8x16xf32>
    %66 = vector.extract_strided_slice %52 {offsets = [0, 234], sizes = [8, 16], strides = [1, 1]} : vector<8x288xf32> to vector<8x16xf32>
    %67 = vector.extract_strided_slice %52 {offsets = [0, 252], sizes = [8, 16], strides = [1, 1]} : vector<8x288xf32> to vector<8x16xf32>
    %68 = vector.extract_strided_slice %52 {offsets = [0, 270], sizes = [8, 16], strides = [1, 1]} : vector<8x288xf32> to vector<8x16xf32>
    %69 = tpu.concatenate %53, %54, %55, %56, %57, %58, %59, %60, %61, %62, %63, %64, %65, %66, %67, %68 in 1 : vector<8x16xf32>, vector<8x16xf32>, vector<8x16xf32>, vector<8x16xf32>, vector<8x16xf32>, vector<8x16xf32>, vector<8x16xf32>, vector<8x16xf32>, vector<8x16xf32>, vector<8x16xf32>, vector<8x16xf32>, vector<8x16xf32>, vector<8x16xf32>, vector<8x16xf32>, vector<8x16xf32>, vector<8x16xf32> -> vector<8x256xf32>
    %70 = arith.truncf %69 : vector<8x256xf32> to vector<8x256xbf16>
    %c0_56 = arith.constant 0 : index
    %c0_57 = arith.constant 0 : index
    %c0_58 = arith.constant 0 : index
    %71 = vector.load %arg4[%c0_56, %c0_57, %c0_58] : memref<1x8x256xbf16, #tpu.memory_space<vmem>>, vector<1x8x256xbf16>
    %72 = vector.shape_cast %71 : vector<1x8x256xbf16> to vector<8x256xbf16>
    %73 = vector.shape_cast %70 : vector<8x256xbf16> to vector<1x8x256xbf16>
    tpu.vector_store %arg4[%c0_56, %c0_57, %c0_58], %73 {strides = array<i32>} : memref<1x8x256xbf16, #tpu.memory_space<vmem>>, vector<1x8x256xbf16>,
    %cst_59 = arith.constant dense<0.000000e+00> : vector<8xf32>
    %74 = vector.multi_reduction <add>, %69, %cst_59 [1] : vector<8x256xf32> to vector<8xf32>
    %75 = vector.shape_cast %74 : vector<8xf32> to vector<8x1xf32>
    %c0_60 = arith.constant 0 : index
    %c0_61 = arith.constant 0 : index
    %c0_62 = arith.constant 0 : index
    %c0_63 = arith.constant 0 : index
    %76 = vector.load %arg5[%c0_60, %c0_61, %c0_62, %c0_63] : memref<1x1x8x1xf32, #tpu.memory_space<vmem>>, vector<1x1x8x1xf32>
    %77 = vector.shape_cast %76 : vector<1x1x8x1xf32> to vector<8x1xf32>
    %78 = vector.shape_cast %75 : vector<8x1xf32> to vector<1x1x8x1xf32>
    tpu.vector_store %arg5[%c0_60, %c0_61, %c0_62, %c0_63], %78 {strides = array<i32>} : memref<1x1x8x1xf32, #tpu.memory_space<vmem>>, vector<1x1x8x1xf32>,
    %79 = arith.mulf %69, %69 : vector<8x256xf32>
    %cst_64 = arith.constant dense<0.000000e+00> : vector<8xf32>
    %80 = vector.multi_reduction <add>, %79, %cst_64 [1] : vector<8x256xf32> to vector<8xf32>
    %81 = vector.shape_cast %80 : vector<8xf32> to vector<8x1xf32>
    %c0_65 = arith.constant 0 : index
    %c0_66 = arith.constant 0 : index
    %c0_67 = arith.constant 0 : index
    %c0_68 = arith.constant 0 : index
    %82 = vector.load %arg6[%c0_65, %c0_66, %c0_67, %c0_68] : memref<1x1x8x1xf32, #tpu.memory_space<vmem>>, vector<1x1x8x1xf32>
    %83 = vector.shape_cast %82 : vector<1x1x8x1xf32> to vector<8x1xf32>
    %84 = vector.shape_cast %81 : vector<8x1xf32> to vector<1x1x8x1xf32>
    tpu.vector_store %arg6[%c0_65, %c0_66, %c0_67, %c0_68], %84 {strides = array<i32>} : memref<1x1x8x1xf32, #tpu.memory_space<vmem>>, vector<1x1x8x1xf32>,
    return
  }
  func.func @transform_0(%arg0: i32, %arg1: i32) -> (i32, i32, i32, i32) {
    %c0_i32 = arith.constant 0 : i32
    %c0_i32_0 = arith.constant 0 : i32
    %c0_i32_1 = arith.constant 0 : i32
    return %arg0, %arg1, %c0_i32, %c0_i32_0 : i32, i32, i32, i32
  }
  func.func @transform_1(%arg0: i32, %arg1: i32) -> (i32, i32, i32) {
    %c0_i32 = arith.constant 0 : i32
    %c0_i32_0 = arith.constant 0 : i32
    %c0_i32_1 = arith.constant 0 : i32
    %c0_i32_2 = arith.constant 0 : i32
    return %c0_i32, %c0_i32_0, %c0_i32_1 : i32, i32, i32
  }
  func.func @transform_2(%arg0: i32, %arg1: i32) -> (i32, i32, i32) {
    %c0_i32 = arith.constant 0 : i32
    %c0_i32_0 = arith.constant 0 : i32
    return %arg0, %c0_i32, %arg1 : i32, i32, i32
  }
  func.func @transform_3(%arg0: i32, %arg1: i32) -> (i32, i32, i32, i32) {
    %c0_i32 = arith.constant 0 : i32
    %c0_i32_0 = arith.constant 0 : i32
    %c0_i32_1 = arith.constant 0 : i32
    return %arg0, %arg1, %c0_i32, %c0_i32_0 : i32, i32, i32, i32
  }
  func.func @transform_4(%arg0: i32, %arg1: i32) -> (i32, i32, i32, i32) {
    %c0_i32 = arith.constant 0 : i32
    %c0_i32_0 = arith.constant 0 : i32
    %c0_i32_1 = arith.constant 0 : i32
    return %arg0, %arg1, %c0_i32, %c0_i32_0 : i32, i32, i32, i32
  }
}

</mosaic_0001>

<llo_original>
// kernel: conv_block_forward.3
$region0: #{conv_block_forward.3}
  #allocation0 [shape = 'u32[]', space=smem, size = 0x4, offset = 0x4, fixed_abs, tag = 'smem constant byte address 0x4 - core index']
  #allocation1 [shape = 'u32[72,128]{1,0:T(1,128)}', space=vmem, size = 0x9000, scoped, tag = 'internal scratch']
  %s0 = inlined_call_operand.vmem [shape: bf16[2,8,256], index: 0, kind: input, shape index: {}]
  %s1 = inlined_call_operand.vmem [shape: f32[2,1,8,1], index: 1, kind: input, shape index: {}]
  %s2 = inlined_call_operand.vmem [shape: f32[2,1,8,1], index: 2, kind: input, shape index: {}]
  %s3 = inlined_call_operand.vmem [shape: f32[8,1], index: 3, kind: input, shape index: {}]
  %s4 = inlined_call_operand.vmem [shape: f32[8,1], index: 4, kind: input, shape index: {}]
  %s5 = inlined_call_operand.vmem [shape: f32[2,8,256], index: 5, kind: output, shape index: {}]
  %s6 = sld [smem:[#allocation0]]
  $region53: #{conv_block_forward.3} parent=0
    _
  %s8 = ssub.s32 1, %s6
  %s9 = scalar_select 0, %s8, %s6
  loop: start=0, step=1, limit=4
  $region2: #{conv_block_forward.3} parent=0 // loop_pre_header
    _
  $region3: #{conv_block_forward.3} parent=0 // loop_header
    %s11 = sphi 0, %s15
    %p12 = scmp.ge.s32.totalorder %s11, 4
    %s18 = sphi 0, %s30
    %s19 = sphi 0, %s26
    %s20 = sphi 0, %s18
    %s21 = sphi 0, %s19
    %s22 = sphi 0, %s20
    %s23 = sphi 0, %s21
    %s35 = sphi 0, %s37
    %s38 = sphi 0, %s35
    %s39 = sphi 0, %s38
    %s55 = sphi 0, %s39
    %s59 = sphi 0, %s59
    %s61 = sphi 0, %s59
    %s62 = sphi 0, %s61
    %s76 = sphi 0, %s62
    %s80 = sphi 0, %s80
    %s82 = sphi 0, %s80
    %s83 = sphi 0, %s82
    %s97 = sphi 0, %s83
    %s101 = sphi 0, %s101
    %s103 = sphi 0, %s101
    %s104 = sphi 0, %s103
    %s118 = sphi 0, %s104
    %s122 = sphi 0, %s122
    %s124 = sphi 0, %s122
    %s125 = sphi 0, %s124
    %s139 = sphi 0, %s125
    %s147 = sphi 0, %s149
    %s150 = sphi 0, %s147
    %s151 = sphi 0, %s150
    %s167 = sphi 0, %s151
  $region4: #{conv_block_forward.3} parent=0 // loop_header_branch
    %14 = sbr.rel (%p12) target = $region8
  $region5: #{conv_block_forward.3} parent=0 // loop_body
    %s16 = ssub.s32 %s11, 1
    %s17 = ssub.s32 %s11, 2
    %s24 = sadd.s32 1, %s19
    %p25 = scmp.ge.s32.totalorder %s24, 1
    %s26 = scalar_select %p25, 0, %s24
    %s27 = sadd.s32 1, %s18
    %s28 = scalar_select %p25, %s27, %s18
    %p29 = scmp.ge.s32.totalorder %s28, 2
    %s30 = scalar_select %p29, 0, %s28
    %s31 = ssub.s32 %s18, %s30
    %s32 = ssub.s32 %s19, %s26
    %s33 = sor.u32 %s31, %s32
    %p34 = scmp.eq.s32.totalorder %s33, 0
    %s36 = sadd.s32 %s35, 1
    %s37 = scalar_select %p34, %s35, %s36
    %p40 = pneg %p34
    %p41 = scmp.eq.s32.totalorder %s11, 1
    %p42 = por %p40, %p41
    %p43 = scmp.ne.s32.totalorder %s35, %s38
    %p44 = scmp.eq.s32.totalorder %s11, 0
    %p45 = por %p43, %p44
    %p46 = scmp.ne.s32.totalorder %s35, %s38
    %p47 = scmp.eq.s32.totalorder %s16, 1
    %p48 = por %p46, %p47
    %p49 = scmp.ne.s32.totalorder %s38, %s39
    %p50 = scmp.eq.s32.totalorder %s16, 0
    %p51 = por %p49, %p50
    %p52 = scmp.ne.s32.totalorder %s38, %s39
    %p53 = scmp.eq.s32.totalorder %s17, 1
    %p54 = por %p52, %p53
    %p56 = scmp.ne.s32.totalorder %s39, %s55
    %p57 = scmp.eq.s32.totalorder %s17, 0
    %p58 = por %p56, %p57
    %s60 = sadd.s32 %s59, 1
    %p63 = scmp.eq.s32.totalorder %s11, 1
    %p64 = scmp.ne.s32.totalorder %s59, %s61
    %p65 = scmp.eq.s32.totalorder %s11, 0
    %p66 = por %p64, %p65
    %p67 = scmp.ne.s32.totalorder %s59, %s61
    %p68 = scmp.eq.s32.totalorder %s16, 1
    %p69 = por %p67, %p68
    %p70 = scmp.ne.s32.totalorder %s61, %s62
    %p71 = scmp.eq.s32.totalorder %s16, 0
    %p72 = por %p70, %p71
    %p73 = scmp.ne.s32.totalorder %s61, %s62
    %p74 = scmp.eq.s32.totalorder %s17, 1
    %p75 = por %p73, %p74
    %p77 = scmp.ne.s32.totalorder %s62, %s76
    %p78 = scmp.eq.s32.totalorder %s17, 0
    %p79 = por %p77, %p78
    %s81 = sadd.s32 %s80, 1
    %p84 = scmp.eq.s32.totalorder %s11, 1
    %p85 = scmp.ne.s32.totalorder %s80, %s82
    %p86 = scmp.eq.s32.totalorder %s11, 0
    %p87 = por %p85, %p86
    %p88 = scmp.ne.s32.totalorder %s80, %s82
    %p89 = scmp.eq.s32.totalorder %s16, 1
    %p90 = por %p88, %p89
    %p91 = scmp.ne.s32.totalorder %s82, %s83
    %p92 = scmp.eq.s32.totalorder %s16, 0
    %p93 = por %p91, %p92
    %p94 = scmp.ne.s32.totalorder %s82, %s83
    %p95 = scmp.eq.s32.totalorder %s17, 1
    %p96 = por %p94, %p95
    %p98 = scmp.ne.s32.totalorder %s83, %s97
    %p99 = scmp.eq.s32.totalorder %s17, 0
    %p100 = por %p98, %p99
    %s102 = sadd.s32 %s101, 1
    %p105 = scmp.eq.s32.totalorder %s11, 1
    %p106 = scmp.ne.s32.totalorder %s101, %s103
    %p107 = scmp.eq.s32.totalorder %s11, 0
    %p108 = por %p106, %p107
    %p109 = scmp.ne.s32.totalorder %s101, %s103
    %p110 = scmp.eq.s32.totalorder %s16, 1
    %p111 = por %p109, %p110
    %p112 = scmp.ne.s32.totalorder %s103, %s104
    %p113 = scmp.eq.s32.totalorder %s16, 0
    %p114 = por %p112, %p113
    %p115 = scmp.ne.s32.totalorder %s103, %s104
    %p116 = scmp.eq.s32.totalorder %s17, 1
    %p117 = por %p115, %p116
    %p119 = scmp.ne.s32.totalorder %s104, %s118
    %p120 = scmp.eq.s32.totalorder %s17, 0
    %p121 = por %p119, %p120
    %s123 = sadd.s32 %s122, 1
    %p126 = scmp.eq.s32.totalorder %s11, 1
    %p127 = scmp.ne.s32.totalorder %s122, %s124
    %p128 = scmp.eq.s32.totalorder %s11, 0
    %p129 = por %p127, %p128
    %p130 = scmp.ne.s32.totalorder %s122, %s124
    %p131 = scmp.eq.s32.totalorder %s16, 1
    %p132 = por %p130, %p131
    %p133 = scmp.ne.s32.totalorder %s124, %s125
    %p134 = scmp.eq.s32.totalorder %s16, 0
    %p135 = por %p133, %p134
    %p136 = scmp.ne.s32.totalorder %s124, %s125
    %p137 = scmp.eq.s32.totalorder %s17, 1
    %p138 = por %p136, %p137
    %p140 = scmp.ne.s32.totalorder %s125, %s139
    %p141 = scmp.eq.s32.totalorder %s17, 0
    %p142 = por %p140, %p141
    %s143 = ssub.s32 %s18, %s30
    %s144 = ssub.s32 %s19, %s26
    %s145 = sor.u32 %s143, %s144
    %p146 = scmp.eq.s32.totalorder %s145, 0
    %s148 = sadd.s32 %s147, 1
    %s149 = scalar_select %p146, %s147, %s148
    %p152 = pneg %p146
    %p153 = scmp.eq.s32.totalorder %s11, 1
    %p154 = por %p152, %p153
    %p155 = scmp.ne.s32.totalorder %s147, %s150
    %p156 = scmp.eq.s32.totalorder %s11, 0
    %p157 = por %p155, %p156
    %p158 = scmp.ne.s32.totalorder %s147, %s150
    %p159 = scmp.eq.s32.totalorder %s16, 1
    %p160 = por %p158, %p159
    %p161 = scmp.ne.s32.totalorder %s150, %s151
    %p162 = scmp.eq.s32.totalorder %s16, 0
    %p163 = por %p161, %p162
    %p164 = scmp.ne.s32.totalorder %s150, %s151
    %p165 = scmp.eq.s32.totalorder %s17, 1
    %p166 = por %p164, %p165
    %p168 = scmp.ne.s32.totalorder %s151, %s167
    %p169 = scmp.eq.s32.totalorder %s17, 0
    %p170 = por %p168, %p169
    %p171 = scmp.le.s32.totalorder 1, %s11
    %p172 = scmp.lt.s32.totalorder %s11, 3
    %p173 = pnand %p171, %p172
    %p174 = pneg %p173
    // Predicated region
    $region9: #{conv_block_forward.3} parent=5 // pred_check
      _
    $region10: #{conv_block_forward.3} parent=5 // pred_check_branch
      %176 = sbr.rel (%p173) target = $region12
    $region11: #{conv_block_forward.3} parent=5 // pred_region
      %s177 = ssub.s32 %s11, 1
      // Predicated region
      $region13: #{conv_block_forward.3} parent=11 // pred_check
        %p178 = pneg %p72
      $region14: #{conv_block_forward.3} parent=11 // pred_check_branch
        %180 = sbr.rel (%p178) target = $region16
      $region15: #{conv_block_forward.3} parent=11 // pred_region
        _
      $region16: #{conv_block_forward.3} parent=11 // pred_fallthru
        _
      // Predicated region
      $region17: #{conv_block_forward.3} parent=11 // pred_check
        %p181 = pneg %p93
      $region18: #{conv_block_forward.3} parent=11 // pred_check_branch
        %183 = sbr.rel (%p181) target = $region20
      $region19: #{conv_block_forward.3} parent=11 // pred_region
        _
      $region20: #{conv_block_forward.3} parent=11 // pred_fallthru
        _
      // Predicated region
      $region21: #{conv_block_forward.3} parent=11 // pred_check
        %p184 = pneg %p114
      $region22: #{conv_block_forward.3} parent=11 // pred_check_branch
        %186 = sbr.rel (%p184) target = $region24
      $region23: #{conv_block_forward.3} parent=11 // pred_region
        _
      $region24: #{conv_block_forward.3} parent=11 // pred_fallthru
        _
      // Predicated region
      $region25: #{conv_block_forward.3} parent=11 // pred_check
        %p187 = pneg %p135
      $region26: #{conv_block_forward.3} parent=11 // pred_check_branch
        %189 = sbr.rel (%p187) target = $region28
      $region27: #{conv_block_forward.3} parent=11 // pred_region
        _
      $region28: #{conv_block_forward.3} parent=11 // pred_fallthru
        _
    $region12: #{conv_block_forward.3} parent=5 // pred_fallthru
      _
    %p190 = scmp.lt.s32.totalorder %s11, 2
    // Predicated region
    $region29: #{conv_block_forward.3} parent=5 // pred_check
      %p191 = pneg %p190
    $region30: #{conv_block_forward.3} parent=5 // pred_check_branch
      %193 = sbr.rel (%p191) target = $region32
    $region31: #{conv_block_forward.3} parent=5 // pred_region
      // Predicated region
      $region33: #{conv_block_forward.3} parent=31 // pred_check
        %p194 = pneg %p45
      $region34: #{conv_block_forward.3} parent=31 // pred_check_branch
        %196 = sbr.rel (%p194) target = $region36
      $region35: #{conv_block_forward.3} parent=31 // pred_region
        %s197 = smul.u32 2, %s19
        %p198 = scmp.lt.s32.totalorder %s18, 1
        %s199 = scalar_select %p198, %s18, 1
        %p200 = scmp.lt.s32.totalorder %s197, 1
        %s201 = scalar_select %p200, %s197, 1
        %s202 = smul.addr %s199, 2
        %s203 = sadd.s32 %s201, %s202
        %s204 = smul.addr %s203, 4
        %s205 = scalar_lea.vmem %s0, %s204
        %s206 = smul.u32 2, %s19
      $region36: #{conv_block_forward.3} parent=31 // pred_fallthru
        _
    $region32: #{conv_block_forward.3} parent=5 // pred_fallthru
      _
    %p207 = scmp.le.s32.totalorder 1, %s11
    %p208 = scmp.lt.s32.totalorder %s11, 3
    %p209 = pnand %p207, %p208
    %p210 = pneg %p209
    // Predicated region
    $region37: #{conv_block_forward.3} parent=5 // pred_check
      _
    $region38: #{conv_block_forward.3} parent=5 // pred_check_branch
      %212 = sbr.rel (%p209) target = $region40
    $region39: #{conv_block_forward.3} parent=5 // pred_region
      %s213 = ssub.s32 %s11, 1
      %s214 = smul.u32 2, %s21
      %p215 = scmp.lt.s32.totalorder %s20, 1
      %s216 = scalar_select %p215, %s20, 1
      %p217 = scmp.lt.s32.totalorder %s214, 1
      %s218 = scalar_select %p217, %s214, 1
      %s219 = smul.addr %s216, 2
      %s220 = sadd.s32 %s218, %s219
      %s221 = smul.addr %s220, 4
      %s222 = scalar_lea.vmem %s0, %s221
      %p223 = pneg %p51
      %p224 = pneg %p48
      %p225 = pneg %p72
      %p226 = pneg %p69
      %p227 = pneg %p93
      %p228 = pneg %p90
      %p229 = pneg %p114
      %p230 = pneg %p111
      %p231 = pneg %p135
      %p232 = pneg %p132
      %p233 = pneg %p163
      %p234 = pneg %p160
      %s235 = smul.u32 2, %s21
      %p236 = scmp.lt.s32.totalorder %s20, 1
      %s237 = scalar_select %p236, %s20, 1
      %p238 = scmp.lt.s32.totalorder %s235, 1
      %s239 = scalar_select %p238, %s235, 1
      %s240 = smul.addr %s237, 2
      %s241 = sadd.s32 %s239, %s240
      %s242 = smul.addr %s241, 8
      %s243 = scalar_lea.vmem %s5, %s242
      %s244 = smul.u32 2, %s21
      %p245 = scmp.lt.s32.totalorder %s20, 1
      %s246 = scalar_select %p245, %s20, 1
      %p247 = scmp.lt.s32.totalorder %s244, 1
      %s248 = scalar_select %p247, %s244, 1
      %s249 = smul.addr %s246, 2
      %s250 = sadd.s32 %s248, %s249
      %s251 = smul.addr %s250, 4
      %s252 = scalar_lea.vmem %s0, %s251
      %s253 = smul.u32 2, %s21
      %s254 = smul.u32 2, %s21
      %p255 = scmp.lt.s32.totalorder %s20, 1
      %s256 = scalar_select %p255, %s20, 1
      %p257 = scmp.lt.s32.totalorder %s254, 1
      %s258 = scalar_select %p257, %s254, 1
      %s259 = smul.addr %s256, 2
      %s260 = sadd.s32 %s258, %s259
      %s261 = smul.addr %s260, 8
      %s262 = scalar_lea.vmem %s5, %s261
      %s263 = smul.u32 2, %s21
      %v264 = vld [vmem:[%s1] sm:$0xff]
      %v265 = vld [vmem:[%s1 + $0x8] sm:$0xff]
      %vm266 = vcmask 7168
      %v267 = vsel %vm266, %v264, 0.0
      %v268 = vsel %vm266, %v265, 0.0
      %v269 = vadd.f32 %v267, %v268
      %v270 = vld [vmem:[%s2] sm:$0xff]
      %v271 = vld [vmem:[%s2 + $0x8] sm:$0xff]
      %v272 = vsel %vm266, %v270, 0.0
      %v273 = vsel %vm266, %v271, 0.0
      %v274 = vadd.f32 %v272, %v273
      %v275 = vmul.f32 %v269, 0.001953125
      %v276 = vmul.f32 %v274, 0.001953125
      %v277 = vmul.f32 %v275, %v275
      %v278 = vsub.f32 %v276, %v277
      %v279 = vmax.f32 %v278, 0.0
      %v280 = vld [vmem:[%s3] sm:$0xff]
      %v281 = vadd.f32 %v279, 1e-05
      %v282 = vrsqrt.pop %v281
      %v283 = vmul.f32 %v282, %v281
      %v284 = vmul.f32 %v283, %v282
      %v285 = vmul.f32 0.5, %v284
      %v286 = vsub.f32 1.5, %v285
      %v287 = vmul.f32 %v282, %v286
      %vm288 = vweird.f32 %v281
      %vm289 = vweird.f32 %v282
      %vm290 = vmor %vm288, %vm289
      %v291 = vsel %vm290, %v282, %v287
      %v292 = vmul.f32 %v280, %v291
      %v293 = vld [vmem:[%s4] sm:$0xff]
      %v294 = vmul.f32 %v275, %v292
      %v295 = vsub.f32 %v293, %v294
      %v296 = vld [vmem:[%s252] sm:$0xff]
      %v297 = vunpack.c.l.bf16 %v296
      %v298 = vunpack.c.h.bf16 %v296
      %300 = vset.pattern.permute.xlu0 0
      %301 = vperm.xlu0 %300, %v292
      %v302 = vpop.permute.xlu0 %301
      %v304 = vmul.f32 %v297, %v302
      %v305 = vmul.f32 %v298, %v302
      %307 = vset.pattern.permute.xlu0 0
      %308 = vperm.xlu0 %307, %v295
      %v309 = vpop.permute.xlu0 %308
      %v311 = vadd.f32 %v304, %v309
      %v312 = vadd.f32 %v305, %v309
      %vm313 = vcmp.gt.f32.partialorder %v311, 0.0
      %vm314 = vcmp.gt.f32.partialorder %v312, 0.0
      %v315 = vmul.f32 %v311, 0.2
      %v316 = vmul.f32 %v312, 0.2
      %v317 = vsel %vm313, %v311, %v315
      %v318 = vsel %vm314, %v312, %v316
      %319 = vst [vmem:[%s262] sm:$0xff] %v317
      %320 = vst [vmem:[%s262 + $0x8] sm:$0xff] %v318
      %s321 = smul.u32 2, %s21
      %p322 = scmp.lt.s32.totalorder %s20, 1
      %s323 = scalar_select %p322, %s20, 1
      %p324 = scmp.lt.s32.totalorder %s321, 1
      %s325 = scalar_select %p324, %s321, 1
      %s326 = smul.addr %s323, 2
      %s327 = sadd.s32 %s325, %s326
      %s328 = smul.addr %s327, 8
      %s329 = scalar_lea.vmem %s5, %s328
      // Predicated region
      $region41: #{conv_block_forward.3} parent=39 // pred_check
        %p330 = pneg %p160
      $region42: #{conv_block_forward.3} parent=39 // pred_check_branch
        %332 = sbr.rel (%p330) target = $region44
      $region43: #{conv_block_forward.3} parent=39 // pred_region
        %s333 = smul.u32 2, %s21
      $region44: #{conv_block_forward.3} parent=39 // pred_fallthru
        _
    $region40: #{conv_block_forward.3} parent=5 // pred_fallthru
      _
    %p334 = scmp.le.s32.totalorder 2, %s11
    // Predicated region
    $region45: #{conv_block_forward.3} parent=5 // pred_check
      %p335 = pneg %p334
    $region46: #{conv_block_forward.3} parent=5 // pred_check_branch
      %337 = sbr.rel (%p335) target = $region48
    $region47: #{conv_block_forward.3} parent=5 // pred_region
      %s338 = ssub.s32 %s11, 2
      // Predicated region
      $region49: #{conv_block_forward.3} parent=47 // pred_check
        %p339 = pneg %p166
      $region50: #{conv_block_forward.3} parent=47 // pred_check_branch
        %341 = sbr.rel (%p339) target = $region52
      $region51: #{conv_block_forward.3} parent=47 // pred_region
        %s342 = smul.u32 2, %s23
        %p343 = scmp.lt.s32.totalorder %s22, 1
        %s344 = scalar_select %p343, %s22, 1
        %p345 = scmp.lt.s32.totalorder %s342, 1
        %s346 = scalar_select %p345, %s342, 1
        %s347 = smul.addr %s344, 2
        %s348 = sadd.s32 %s346, %s347
        %s349 = smul.addr %s348, 8
        %s350 = scalar_lea.vmem %s5, %s349
      $region52: #{conv_block_forward.3} parent=47 // pred_fallthru
        _
    $region48: #{conv_block_forward.3} parent=5 // pred_fallthru
      _
  $region6: #{conv_block_forward.3} parent=0 // loop_footer
    %s15 = sadd.s32 1, %s11
  $region7: #{conv_block_forward.3} parent=0 // loop_footer_branch
    %10 = sbr.rel target = $region3
  $region8: #{conv_block_forward.3} parent=0 // loop_exit
    _

// kernel: conv_block_forward.2
$region0: #{conv_block_forward.2}
  #allocation0 [shape = 'u32[]', space=smem, size = 0x4, offset = 0x4, fixed_abs, tag = 'smem constant byte address 0x4 - core index']
  #allocation1 [shape = 'u32[72,128]{1,0:T(1,128)}', space=vmem, size = 0x9000, scoped, tag = 'internal scratch']
  %s0 = inlined_call_operand.vmem [shape: bf16[2,1,4,384], index: 0, kind: input, shape index: {}]
  %s1 = inlined_call_operand.vmem [shape: bf16[9,8,4], index: 1, kind: input, shape index: {}]
  %s2 = inlined_call_operand.vmem [shape: bf16[2,8,256], index: 2, kind: output, shape index: {0}]
  %s3 = inlined_call_operand.vmem [shape: f32[2,1,8,1], index: 3, kind: output, shape index: {1}]
  %s4 = inlined_call_operand.vmem [shape: f32[2,1,8,1], index: 4, kind: output, shape index: {2}]
  %5 = xla_tuple %s2, %s3, %s4
  %s6 = sld [smem:[#allocation0]]
  $region57: #{conv_block_forward.2} parent=0
    _
  %s8 = ssub.s32 1, %s6
  %s9 = scalar_select 0, %s8, %s6
  loop: start=0, step=1, limit=4
  $region2: #{conv_block_forward.2} parent=0 // loop_pre_header
    _
  $region3: #{conv_block_forward.2} parent=0 // loop_header
    %s11 = sphi 0, %s15
    %p12 = scmp.ge.s32.totalorder %s11, 4
    %s18 = sphi 0, %s30
    %s19 = sphi 0, %s26
    %s20 = sphi 0, %s18
    %s21 = sphi 0, %s19
    %s22 = sphi 0, %s20
    %s23 = sphi 0, %s21
    %s35 = sphi 0, %s37
    %s38 = sphi 0, %s35
    %s39 = sphi 0, %s38
    %s55 = sphi 0, %s39
    %s59 = sphi 0, %s59
    %s61 = sphi 0, %s59
    %s62 = sphi 0, %s61
    %s76 = sphi 0, %s62
    %s84 = sphi 0, %s86
    %s87 = sphi 0, %s84
    %s88 = sphi 0, %s87
    %s104 = sphi 0, %s88
    %s112 = sphi 0, %s114
    %s115 = sphi 0, %s112
    %s116 = sphi 0, %s115
    %s132 = sphi 0, %s116
    %s140 = sphi 0, %s142
    %s143 = sphi 0, %s140
    %s144 = sphi 0, %s143
    %s160 = sphi 0, %s144
  $region4: #{conv_block_forward.2} parent=0 // loop_header_branch
    %14 = sbr.rel (%p12) target = $region8
  $region5: #{conv_block_forward.2} parent=0 // loop_body
    %s16 = ssub.s32 %s11, 1
    %s17 = ssub.s32 %s11, 2
    %s24 = sadd.s32 1, %s19
    %p25 = scmp.ge.s32.totalorder %s24, 1
    %s26 = scalar_select %p25, 0, %s24
    %s27 = sadd.s32 1, %s18
    %s28 = scalar_select %p25, %s27, %s18
    %p29 = scmp.ge.s32.totalorder %s28, 2
    %s30 = scalar_select %p29, 0, %s28
    %s31 = ssub.s32 %s18, %s30
    %s32 = ssub.s32 %s19, %s26
    %s33 = sor.u32 %s31, %s32
    %p34 = scmp.eq.s32.totalorder %s33, 0
    %s36 = sadd.s32 %s35, 1
    %s37 = scalar_select %p34, %s35, %s36
    %p40 = pneg %p34
    %p41 = scmp.eq.s32.totalorder %s11, 1
    %p42 = por %p40, %p41
    %p43 = scmp.ne.s32.totalorder %s35, %s38
    %p44 = scmp.eq.s32.totalorder %s11, 0
    %p45 = por %p43, %p44
    %p46 = scmp.ne.s32.totalorder %s35, %s38
    %p47 = scmp.eq.s32.totalorder %s16, 1
    %p48 = por %p46, %p47
    %p49 = scmp.ne.s32.totalorder %s38, %s39
    %p50 = scmp.eq.s32.totalorder %s16, 0
    %p51 = por %p49, %p50
    %p52 = scmp.ne.s32.totalorder %s38, %s39
    %p53 = scmp.eq.s32.totalorder %s17, 1
    %p54 = por %p52, %p53
    %p56 = scmp.ne.s32.totalorder %s39, %s55
    %p57 = scmp.eq.s32.totalorder %s17, 0
    %p58 = por %p56, %p57
    %s60 = sadd.s32 %s59, 1
    %p63 = scmp.eq.s32.totalorder %s11, 1
    %p64 = scmp.ne.s32.totalorder %s59, %s61
    %p65 = scmp.eq.s32.totalorder %s11, 0
    %p66 = por %p64, %p65
    %p67 = scmp.ne.s32.totalorder %s59, %s61
    %p68 = scmp.eq.s32.totalorder %s16, 1
    %p69 = por %p67, %p68
    %p70 = scmp.ne.s32.totalorder %s61, %s62
    %p71 = scmp.eq.s32.totalorder %s16, 0
    %p72 = por %p70, %p71
    %p73 = scmp.ne.s32.totalorder %s61, %s62
    %p74 = scmp.eq.s32.totalorder %s17, 1
    %p75 = por %p73, %p74
    %p77 = scmp.ne.s32.totalorder %s62, %s76
    %p78 = scmp.eq.s32.totalorder %s17, 0
    %p79 = por %p77, %p78
    %s80 = ssub.s32 %s18, %s30
    %s81 = ssub.s32 %s19, %s26
    %s82 = sor.u32 %s80, %s81
    %p83 = scmp.eq.s32.totalorder %s82, 0
    %s85 = sadd.s32 %s84, 1
    %s86 = scalar_select %p83, %s84, %s85
    %p89 = pneg %p83
    %p90 = scmp.eq.s32.totalorder %s11, 1
    %p91 = por %p89, %p90
    %p92 = scmp.ne.s32.totalorder %s84, %s87
    %p93 = scmp.eq.s32.totalorder %s11, 0
    %p94 = por %p92, %p93
    %p95 = scmp.ne.s32.totalorder %s84, %s87
    %p96 = scmp.eq.s32.totalorder %s16, 1
    %p97 = por %p95, %p96
    %p98 = scmp.ne.s32.totalorder %s87, %s88
    %p99 = scmp.eq.s32.totalorder %s16, 0
    %p100 = por %p98, %p99
    %p101 = scmp.ne.s32.totalorder %s87, %s88
    %p102 = scmp.eq.s32.totalorder %s17, 1
    %p103 = por %p101, %p102
    %p105 = scmp.ne.s32.totalorder %s88, %s104
    %p106 = scmp.eq.s32.totalorder %s17, 0
    %p107 = por %p105, %p106
    %s108 = ssub.s32 %s18, %s30
    %s109 = ssub.s32 %s19, %s26
    %s110 = sor.u32 %s108, %s109
    %p111 = scmp.eq.s32.totalorder %s110, 0
    %s113 = sadd.s32 %s112, 1
    %s114 = scalar_select %p111, %s112, %s113
    %p117 = pneg %p111
    %p118 = scmp.eq.s32.totalorder %s11, 1
    %p119 = por %p117, %p118
    %p120 = scmp.ne.s32.totalorder %s112, %s115
    %p121 = scmp.eq.s32.totalorder %s11, 0
    %p122 = por %p120, %p121
    %p123 = scmp.ne.s32.totalorder %s112, %s115
    %p124 = scmp.eq.s32.totalorder %s16, 1
    %p125 = por %p123, %p124
    %p126 = scmp.ne.s32.totalorder %s115, %s116
    %p127 = scmp.eq.s32.totalorder %s16, 0
    %p128 = por %p126, %p127
    %p129 = scmp.ne.s32.totalorder %s115, %s116
    %p130 = scmp.eq.s32.totalorder %s17, 1
    %p131 = por %p129, %p130
    %p133 = scmp.ne.s32.totalorder %s116, %s132
    %p134 = scmp.eq.s32.totalorder %s17, 0
    %p135 = por %p133, %p134
    %s136 = ssub.s32 %s18, %s30
    %s137 = ssub.s32 %s19, %s26
    %s138 = sor.u32 %s136, %s137
    %p139 = scmp.eq.s32.totalorder %s138, 0
    %s141 = sadd.s32 %s140, 1
    %s142 = scalar_select %p139, %s140, %s141
    %p145 = pneg %p139
    %p146 = scmp.eq.s32.totalorder %s11, 1
    %p147 = por %p145, %p146
    %p148 = scmp.ne.s32.totalorder %s140, %s143
    %p149 = scmp.eq.s32.totalorder %s11, 0
    %p150 = por %p148, %p149
    %p151 = scmp.ne.s32.totalorder %s140, %s143
    %p152 = scmp.eq.s32.totalorder %s16, 1
    %p153 = por %p151, %p152
    %p154 = scmp.ne.s32.totalorder %s143, %s144
    %p155 = scmp.eq.s32.totalorder %s16, 0
    %p156 = por %p154, %p155
    %p157 = scmp.ne.s32.totalorder %s143, %s144
    %p158 = scmp.eq.s32.totalorder %s17, 1
    %p159 = por %p157, %p158
    %p161 = scmp.ne.s32.totalorder %s144, %s160
    %p162 = scmp.eq.s32.totalorder %s17, 0
    %p163 = por %p161, %p162
    %p164 = scmp.le.s32.totalorder 1, %s11
    %p165 = scmp.lt.s32.totalorder %s11, 3
    %p166 = pnand %p164, %p165
    %p167 = pneg %p166
    // Predicated region
    $region9: #{conv_block_forward.2} parent=5 // pred_check
      _
    $region10: #{conv_block_forward.2} parent=5 // pred_check_branch
      %169 = sbr.rel (%p166) target = $region12
    $region11: #{conv_block_forward.2} parent=5 // pred_region
      %s170 = ssub.s32 %s11, 1
      // Predicated region
      $region13: #{conv_block_forward.2} parent=11 // pred_check
        %p171 = pneg %p72
      $region14: #{conv_block_forward.2} parent=11 // pred_check_branch
        %173 = sbr.rel (%p171) target = $region16
      $region15: #{conv_block_forward.2} parent=11 // pred_region
        _
      $region16: #{conv_block_forward.2} parent=11 // pred_fallthru
        _
    $region12: #{conv_block_forward.2} parent=5 // pred_fallthru
      _
    %p174 = scmp.lt.s32.totalorder %s11, 2
    // Predicated region
    $region17: #{conv_block_forward.2} parent=5 // pred_check
      %p175 = pneg %p174
    $region18: #{conv_block_forward.2} parent=5 // pred_check_branch
      %177 = sbr.rel (%p175) target = $region20
    $region19: #{conv_block_forward.2} parent=5 // pred_region
      // Predicated region
      $region21: #{conv_block_forward.2} parent=19 // pred_check
        %p178 = pneg %p45
      $region22: #{conv_block_forward.2} parent=19 // pred_check_branch
        %180 = sbr.rel (%p178) target = $region24
      $region23: #{conv_block_forward.2} parent=19 // pred_region
        %p181 = scmp.lt.s32.totalorder %s18, 1
        %s182 = scalar_select %p181, %s18, 1
        %p183 = scmp.lt.s32.totalorder %s19, 0
        %s184 = scalar_select %p183, %s19, 0
        %s185 = smul.addr %s184, 3
        %s186 = smul.addr %s182, 3
        %s187 = sadd.s32 %s185, %s186
        %s188 = smul.addr %s187, 2
        %s189 = scalar_lea.vmem %s0, %s188
      $region24: #{conv_block_forward.2} parent=19 // pred_fallthru
        _
    $region20: #{conv_block_forward.2} parent=5 // pred_fallthru
      _
    %p190 = scmp.le.s32.totalorder 1, %s11
    %p191 = scmp.lt.s32.totalorder %s11, 3
    %p192 = pnand %p190, %p191
    %p193 = pneg %p192
    // Predicated region
    $region25: #{conv_block_forward.2} parent=5 // pred_check
      _
    $region26: #{conv_block_forward.2} parent=5 // pred_check_branch
      %195 = sbr.rel (%p192) target = $region28
    $region27: #{conv_block_forward.2} parent=5 // pred_region
      %s196 = ssub.s32 %s11, 1
      %p197 = scmp.lt.s32.totalorder %s20, 1
      %s198 = scalar_select %p197, %s20, 1
      %p199 = scmp.lt.s32.totalorder %s21, 0
      %s200 = scalar_select %p199, %s21, 0
      %s201 = smul.addr %s200, 3
      %s202 = smul.addr %s198, 3
      %s203 = sadd.s32 %s201, %s202
      %s204 = smul.addr %s203, 2
      %s205 = scalar_lea.vmem %s0, %s204
      %p206 = pneg %p51
      %p207 = pneg %p48
      %p208 = pneg %p72
      %p209 = pneg %p69
      %p210 = pneg %p100
      %p211 = pneg %p97
      %s212 = smul.u32 2, %s21
      %p213 = scmp.lt.s32.totalorder %s20, 1
      %s214 = scalar_select %p213, %s20, 1
      %p215 = scmp.lt.s32.totalorder %s212, 1
      %s216 = scalar_select %p215, %s212, 1
      %s217 = smul.addr %s214, 2
      %s218 = sadd.s32 %s216, %s217
      %s219 = smul.addr %s218, 4
      %s220 = scalar_lea.vmem %s2, %s219
      %p221 = pneg %p128
      %p222 = pneg %p125
      %p223 = scmp.lt.s32.totalorder %s20, 1
      %s224 = scalar_select %p223, %s20, 1
      %p225 = scmp.lt.s32.totalorder %s21, 0
      %s226 = scalar_select %p225, %s21, 0
      %s227 = sadd.s32 %s226, %s224
      %s228 = smul.addr %s227, 8
      %s229 = scalar_lea.vmem %s3, %s228
      %p230 = pneg %p156
      %p231 = pneg %p153
      %p232 = scmp.lt.s32.totalorder %s20, 1
      %s233 = scalar_select %p232, %s20, 1
      %p234 = scmp.lt.s32.totalorder %s21, 0
      %s235 = scalar_select %p234, %s21, 0
      %s236 = sadd.s32 %s235, %s233
      %s237 = smul.addr %s236, 8
      %s238 = scalar_lea.vmem %s4, %s237
      %p239 = scmp.lt.s32.totalorder %s20, 1
      %s240 = scalar_select %p239, %s20, 1
      %p241 = scmp.lt.s32.totalorder %s21, 0
      %s242 = scalar_select %p241, %s21, 0
      %s243 = smul.addr %s242, 3
      %s244 = smul.addr %s240, 3
      %s245 = sadd.s32 %s243, %s244
      %s246 = smul.addr %s245, 2
      %s247 = scalar_lea.vmem %s0, %s246
      %s248 = smul.u32 2, %s21
      %p249 = scmp.lt.s32.totalorder %s20, 1
      %s250 = scalar_select %p249, %s20, 1
      %p251 = scmp.lt.s32.totalorder %s248, 1
      %s252 = scalar_select %p251, %s248, 1
      %s253 = smul.addr %s250, 2
      %s254 = sadd.s32 %s252, %s253
      %s255 = smul.addr %s254, 4
      %s256 = scalar_lea.vmem %s2, %s255
      %s257 = smul.u32 2, %s21
      %p258 = scmp.lt.s32.totalorder %s20, 1
      %s259 = scalar_select %p258, %s20, 1
      %p260 = scmp.lt.s32.totalorder %s21, 0
      %s261 = scalar_select %p260, %s21, 0
      %s262 = sadd.s32 %s261, %s259
      %s263 = smul.addr %s262, 8
      %s264 = scalar_lea.vmem %s3, %s263
      %p265 = scmp.lt.s32.totalorder %s20, 1
      %s266 = scalar_select %p265, %s20, 1
      %p267 = scmp.lt.s32.totalorder %s21, 0
      %s268 = scalar_select %p267, %s21, 0
      %s269 = sadd.s32 %s268, %s266
      %s270 = smul.addr %s269, 8
      %s271 = scalar_lea.vmem %s4, %s270
      %v273 = vld [vmem:[%s247] sm:$0x3f]
      %v274 = vld [vmem:[%s1] sm:$0xf]
      %s275 = scalar_lea.vmem %s1, 4
      %v276 = vld [vmem:[%s275] sm:$0xf]
      %278 = vst [vmem:[#allocation1] ss:$4 sm:$0xff] %v273
      %v279 = vld.sshfl [vmem:[#allocation1] sm:$0xff pattern:$0x73625140]
      %v281 = vld.sshfl [vmem:[#allocation1 + $0x8] sm:$0xff pattern:$0x73625140]
      %v283 = vld.sshfl [vmem:[#allocation1 + $0x10] sm:$0xff pattern:$0x73625140]
      %285 = vrot.lane.b32.xlu0 %v279, 127
      %v286 = vpop.permute.xlu0 %285
      %287 = vrot.lane.b32.xlu0 %v281, 127
      %v288 = vpop.permute.xlu0 %287
      %289 = vrot.lane.b32.xlu0 %v283, 127
      %v290 = vpop.permute.xlu0 %289
      %vm291 = vcmask 1039360
      %v292 = vsel %vm291, %v286, %v288
      %v293 = vsel %vm291, %v288, %v290
      %vm294 = vcmask 31744
      %v296 = vsel %vm294, %v276, 0
      %vm298 = vcmask 1041408
      %v300 = vsel %vm298, %v292, 0
      %v303 = vsel %vm298, %v293, 0
      %v306 = vsel %vm298, %v290, 0
      %308 = vmatpush.bf16.msra.mxu0 0
      %309 = vmatpush.bf16.msra.mxu0 0
      %310 = vmatpush.bf16.msra.mxu0 0
      %311 = vmatpush.bf16.msra.mxu0 0
      %312 = vmatpush.bf16.msra.mxu0 0
      %313 = vmatpush.bf16.msra.mxu0 0
      %314 = vmatpush.bf16.msra.mxu0 0
      %315 = vmatpush.bf16.msra.mxu0 %v300
      %316 = vmatmul.bf16.gmra.mxu0 %v296
      %v317 = vpop.f32.mrf.mxu0
      %v318 = vadd.f32 0.0, %v317
      %v319 = vpop.f32.mrf.mxu0
      %320 = vdwg.mxu0
      %321 = vmatpush.bf16.msra.mxu0 0
      %322 = vmatpush.bf16.msra.mxu0 0
      %323 = vmatpush.bf16.msra.mxu0 0
      %324 = vmatpush.bf16.msra.mxu0 0
      %325 = vmatpush.bf16.msra.mxu0 0
      %326 = vmatpush.bf16.msra.mxu0 0
      %327 = vmatpush.bf16.msra.mxu0 0
      %328 = vmatpush.bf16.msra.mxu0 %v303
      %329 = vmatmul.bf16.gmra.mxu0 %v296
      %v330 = vpop.f32.mrf.mxu0
      %v331 = vadd.f32 0.0, %v330
      %v332 = vpop.f32.mrf.mxu0
      %333 = vdwg.mxu0
      %334 = vmatpush.bf16.msra.mxu0 0
      %335 = vmatpush.bf16.msra.mxu0 0
      %336 = vmatpush.bf16.msra.mxu0 0
      %337 = vmatpush.bf16.msra.mxu0 0
      %338 = vmatpush.bf16.msra.mxu0 0
      %339 = vmatpush.bf16.msra.mxu0 0
      %340 = vmatpush.bf16.msra.mxu0 0
      %341 = vmatpush.bf16.msra.mxu0 %v306
      %342 = vmatmul.bf16.gmra.mxu0 %v296
      %v343 = vpop.f32.mrf.mxu0
      %v344 = vadd.f32 0.0, %v343
      %v345 = vpop.f32.mrf.mxu0
      %346 = vdwg.mxu0
      %347 = vst [vmem:[#allocation1] ss:$4 sm:$0xff] %v273
      %v348 = vld.sshfl [vmem:[#allocation1] sm:$0xff pattern:$0x73625140]
      %v349 = vld.sshfl [vmem:[#allocation1 + $0x8] sm:$0xff pattern:$0x73625140]
      %v350 = vld.sshfl [vmem:[#allocation1 + $0x10] sm:$0xff pattern:$0x73625140]
      %v352 = vsel %vm294, %v274, 0
      %v354 = vsel %vm298, %v348, 0
      %v356 = vsel %vm298, %v349, 0
      %v358 = vsel %vm298, %v350, 0
      %360 = vmatpush.bf16.msra.mxu0 0
      %361 = vmatpush.bf16.msra.mxu0 0
      %362 = vmatpush.bf16.msra.mxu0 0
      %363 = vmatpush.bf16.msra.mxu0 0
      %364 = vmatpush.bf16.msra.mxu0 0
      %365 = vmatpush.bf16.msra.mxu0 0
      %366 = vmatpush.bf16.msra.mxu0 0
      %367 = vmatpush.bf16.msra.mxu0 %v354
      %368 = vmatmul.bf16.gmra.mxu0 %v352
      %v369 = vpop.f32.mrf.mxu0
      %v370 = vadd.f32 %v318, %v369
      %v371 = vpop.f32.mrf.mxu0
      %372 = vdwg.mxu0
      %373 = vmatpush.bf16.msra.mxu0 0
      %374 = vmatpush.bf16.msra.mxu0 0
      %375 = vmatpush.bf16.msra.mxu0 0
      %376 = vmatpush.bf16.msra.mxu0 0
      %377 = vmatpush.bf16.msra.mxu0 0
      %378 = vmatpush.bf16.msra.mxu0 0
      %379 = vmatpush.bf16.msra.mxu0 0
      %380 = vmatpush.bf16.msra.mxu0 %v356
      %381 = vmatmul.bf16.gmra.mxu0 %v352
      %v382 = vpop.f32.mrf.mxu0
      %v383 = vadd.f32 %v331, %v382
      %v384 = vpop.f32.mrf.mxu0
      %385 = vdwg.mxu0
      %386 = vmatpush.bf16.msra.mxu0 0
      %387 = vmatpush.bf16.msra.mxu0 0
      %388 = vmatpush.bf16.msra.mxu0 0
      %389 = vmatpush.bf16.msra.mxu0 0
      %390 = vmatpush.bf16.msra.mxu0 0
      %391 = vmatpush.bf16.msra.mxu0 0
      %392 = vmatpush.bf16.msra.mxu0 0
      %393 = vmatpush.bf16.msra.mxu0 %v358
      %394 = vmatmul.bf16.gmra.mxu0 %v352
      %v395 = vpop.f32.mrf.mxu0
      %v396 = vadd.f32 %v344, %v395
      %v397 = vpop.f32.mrf.mxu0
      %398 = vdwg.mxu0
      %v399 = vld [vmem:[%s247] sm:$0x3f]
      %s400 = scalar_lea.vmem %s1, 8
      %v401 = vld [vmem:[%s400] sm:$0xf]
      %403 = vst [vmem:[#allocation1] ss:$4 sm:$0xff] %v399
      %v404 = vld.sshfl [vmem:[#allocation1] sm:$0xff pattern:$0x73625140]
      %v406 = vld.sshfl [vmem:[#allocation1 + $0x8] sm:$0xff pattern:$0x73625140]
      %v408 = vld.sshfl [vmem:[#allocation1 + $0x10] sm:$0xff pattern:$0x73625140]
      %410 = vrot.lane.b32.xlu0 %v404, 126
      %v411 = vpop.permute.xlu0 %410
      %412 = vrot.lane.b32.xlu0 %v406, 126
      %v413 = vpop.permute.xlu0 %412
      %414 = vrot.lane.b32.xlu0 %v408, 126
      %v415 = vpop.permute.xlu0 %414
      %vm416 = vcmask 1031168
      %v417 = vsel %vm416, %v411, %v413
      %v418 = vsel %vm416, %v413, %v415
      %v420 = vsel %vm294, %v401, 0
      %v423 = vsel %vm298, %v417, 0
      %v426 = vsel %vm298, %v418, 0
      %v429 = vsel %vm298, %v415, 0
      %431 = vmatpush.bf16.msra.mxu0 0
      %432 = vmatpush.bf16.msra.mxu0 0
      %433 = vmatpush.bf16.msra.mxu0 0
      %434 = vmatpush.bf16.msra.mxu0 0
      %435 = vmatpush.bf16.msra.mxu0 0
      %436 = vmatpush.bf16.msra.mxu0 0
      %437 = vmatpush.bf16.msra.mxu0 0
      %438 = vmatpush.bf16.msra.mxu0 %v423
      %439 = vmatmul.bf16.gmra.mxu0 %v420
      %v440 = vpop.f32.mrf.mxu0
      %v441 = vadd.f32 0.0, %v440
      %v442 = vpop.f32.mrf.mxu0
      %443 = vdwg.mxu0
      %444 = vmatpush.bf16.msra.mxu0 0
      %445 = vmatpush.bf16.msra.mxu0 0
      %446 = vmatpush.bf16.msra.mxu0 0
      %447 = vmatpush.bf16.msra.mxu0 0
      %448 = vmatpush.bf16.msra.mxu0 0
      %449 = vmatpush.bf16.msra.mxu0 0
      %450 = vmatpush.bf16.msra.mxu0 0
      %451 = vmatpush.bf16.msra.mxu0 %v426
      %452 = vmatmul.bf16.gmra.mxu0 %v420
      %v453 = vpop.f32.mrf.mxu0
      %v454 = vadd.f32 0.0, %v453
      %v455 = vpop.f32.mrf.mxu0
      %456 = vdwg.mxu0
      %457 = vmatpush.bf16.msra.mxu0 0
      %458 = vmatpush.bf16.msra.mxu0 0
      %459 = vmatpush.bf16.msra.mxu0 0
      %460 = vmatpush.bf16.msra.mxu0 0
      %461 = vmatpush.bf16.msra.mxu0 0
      %462 = vmatpush.bf16.msra.mxu0 0
      %463 = vmatpush.bf16.msra.mxu0 0
      %464 = vmatpush.bf16.msra.mxu0 %v429
      %465 = vmatmul.bf16.gmra.mxu0 %v420
      %v466 = vpop.f32.mrf.mxu0
      %v467 = vadd.f32 0.0, %v466
      %v468 = vpop.f32.mrf.mxu0
      %469 = vdwg.mxu0
      %v470 = vadd.f32 %v370, %v441
      %v471 = vadd.f32 %v383, %v454
      %v472 = vadd.f32 %v396, %v467
      %v473 = vld [vmem:[%s247] sm:$0x3f]
      %s474 = scalar_lea.vmem %s1, 12
      %v475 = vld [vmem:[%s474] sm:$0xf]
      %477 = vst [vmem:[#allocation1] ss:$4 sm:$0xff] %v473
      %v478 = vld.sshfl [vmem:[#allocation1] sm:$0xff pattern:$0x73625140]
      %v480 = vld.sshfl [vmem:[#allocation1 + $0x8] sm:$0xff pattern:$0x73625140]
      %v482 = vld.sshfl [vmem:[#allocation1 + $0x10] sm:$0xff pattern:$0x73625140]
      %484 = vrot.lane.b32.xlu0 %v478, 110
      %v485 = vpop.permute.xlu0 %484
      %486 = vrot.lane.b32.xlu0 %v480, 110
      %v487 = vpop.permute.xlu0 %486
      %488 = vrot.lane.b32.xlu0 %v482, 110
      %v489 = vpop.permute.xlu0 %488
      %vm490 = vcmask 900096
      %v491 = vsel %vm490, %v485, %v487
      %v492 = vsel %vm490, %v487, %v489
      %v494 = vsel %vm294, %v475, 0
      %v497 = vsel %vm298, %v491, 0
      %v500 = vsel %vm298, %v492, 0
      %v503 = vsel %vm298, %v489, 0
      %505 = vmatpush.bf16.msra.mxu0 0
      %506 = vmatpush.bf16.msra.mxu0 0
      %507 = vmatpush.bf16.msra.mxu0 0
      %508 = vmatpush.bf16.msra.mxu0 0
      %509 = vmatpush.bf16.msra.mxu0 0
      %510 = vmatpush.bf16.msra.mxu0 0
      %511 = vmatpush.bf16.msra.mxu0 0
      %512 = vmatpush.bf16.msra.mxu0 %v497
      %513 = vmatmul.bf16.gmra.mxu0 %v494
      %v514 = vpop.f32.mrf.mxu0
      %v515 = vadd.f32 0.0, %v514
      %v516 = vpop.f32.mrf.mxu0
      %517 = vdwg.mxu0
      %518 = vmatpush.bf16.msra.mxu0 0
      %519 = vmatpush.bf16.msra.mxu0 0
      %520 = vmatpush.bf16.msra.mxu0 0
      %521 = vmatpush.bf16.msra.mxu0 0
      %522 = vmatpush.bf16.msra.mxu0 0
      %523 = vmatpush.bf16.msra.mxu0 0
      %524 = vmatpush.bf16.msra.mxu0 0
      %525 = vmatpush.bf16.msra.mxu0 %v500
      %526 = vmatmul.bf16.gmra.mxu0 %v494
      %v527 = vpop.f32.mrf.mxu0
      %v528 = vadd.f32 0.0, %v527
      %v529 = vpop.f32.mrf.mxu0
      %530 = vdwg.mxu0
      %531 = vmatpush.bf16.msra.mxu0 0
      %532 = vmatpush.bf16.msra.mxu0 0
      %533 = vmatpush.bf16.msra.mxu0 0
      %534 = vmatpush.bf16.msra.mxu0 0
      %535 = vmatpush.bf16.msra.mxu0 0
      %536 = vmatpush.bf16.msra.mxu0 0
      %537 = vmatpush.bf16.msra.mxu0 0
      %538 = vmatpush.bf16.msra.mxu0 %v503
      %539 = vmatmul.bf16.gmra.mxu0 %v494
      %v540 = vpop.f32.mrf.mxu0
      %v541 = vadd.f32 0.0, %v540
      %v542 = vpop.f32.mrf.mxu0
      %543 = vdwg.mxu0
      %v544 = vadd.f32 %v470, %v515
      %v545 = vadd.f32 %v471, %v528
      %v546 = vadd.f32 %v472, %v541
      %v547 = vld [vmem:[%s247] sm:$0x3f]
      %s548 = scalar_lea.vmem %s1, 16
      %v549 = vld [vmem:[%s548] sm:$0xf]
      %551 = vst [vmem:[#allocation1] ss:$4 sm:$0xff] %v547
      %v552 = vld.sshfl [vmem:[#allocation1] sm:$0xff pattern:$0x73625140]
      %v554 = vld.sshfl [vmem:[#allocation1 + $0x8] sm:$0xff pattern:$0x73625140]
      %v556 = vld.sshfl [vmem:[#allocation1 + $0x10] sm:$0xff pattern:$0x73625140]
      %558 = vrot.lane.b32.xlu0 %v552, 109
      %v559 = vpop.permute.xlu0 %558
      %560 = vrot.lane.b32.xlu0 %v554, 109
      %v561 = vpop.permute.xlu0 %560
      %562 = vrot.lane.b32.xlu0 %v556, 109
      %v563 = vpop.permute.xlu0 %562
      %vm564 = vcmask 891904
      %v565 = vsel %vm564, %v559, %v561
      %v566 = vsel %vm564, %v561, %v563
      %v568 = vsel %vm294, %v549, 0
      %v571 = vsel %vm298, %v565, 0
      %v574 = vsel %vm298, %v566, 0
      %v577 = vsel %vm298, %v563, 0
      %579 = vmatpush.bf16.msra.mxu0 0
      %580 = vmatpush.bf16.msra.mxu0 0
      %581 = vmatpush.bf16.msra.mxu0 0
      %582 = vmatpush.bf16.msra.mxu0 0
      %583 = vmatpush.bf16.msra.mxu0 0
      %584 = vmatpush.bf16.msra.mxu0 0
      %585 = vmatpush.bf16.msra.mxu0 0
      %586 = vmatpush.bf16.msra.mxu0 %v571
      %587 = vmatmul.bf16.gmra.mxu0 %v568
      %v588 = vpop.f32.mrf.mxu0
      %v589 = vadd.f32 0.0, %v588
      %v590 = vpop.f32.mrf.mxu0
      %591 = vdwg.mxu0
      %592 = vmatpush.bf16.msra.mxu0 0
      %593 = vmatpush.bf16.msra.mxu0 0
      %594 = vmatpush.bf16.msra.mxu0 0
      %595 = vmatpush.bf16.msra.mxu0 0
      %596 = vmatpush.bf16.msra.mxu0 0
      %597 = vmatpush.bf16.msra.mxu0 0
      %598 = vmatpush.bf16.msra.mxu0 0
      %599 = vmatpush.bf16.msra.mxu0 %v574
      %600 = vmatmul.bf16.gmra.mxu0 %v568
      %v601 = vpop.f32.mrf.mxu0
      %v602 = vadd.f32 0.0, %v601
      %v603 = vpop.f32.mrf.mxu0
      %604 = vdwg.mxu0
      %605 = vmatpush.bf16.msra.mxu0 0
      %606 = vmatpush.bf16.msra.mxu0 0
      %607 = vmatpush.bf16.msra.mxu0 0
      %608 = vmatpush.bf16.msra.mxu0 0
      %609 = vmatpush.bf16.msra.mxu0 0
      %610 = vmatpush.bf16.msra.mxu0 0
      %611 = vmatpush.bf16.msra.mxu0 0
      %612 = vmatpush.bf16.msra.mxu0 %v577
      %613 = vmatmul.bf16.gmra.mxu0 %v568
      %v614 = vpop.f32.mrf.mxu0
      %v615 = vadd.f32 0.0, %v614
      %v616 = vpop.f32.mrf.mxu0
      %617 = vdwg.mxu0
      %v618 = vadd.f32 %v544, %v589
      %v619 = vadd.f32 %v545, %v602
      %v620 = vadd.f32 %v546, %v615
      %v621 = vld [vmem:[%s247] sm:$0x3f]
      %s622 = scalar_lea.vmem %s1, 20
      %v623 = vld [vmem:[%s622] sm:$0xf]
      %625 = vst [vmem:[#allocation1] ss:$4 sm:$0xff] %v621
      %v626 = vld.sshfl [vmem:[#allocation1] sm:$0xff pattern:$0x73625140]
      %v628 = vld.sshfl [vmem:[#allocation1 + $0x8] sm:$0xff pattern:$0x73625140]
      %v630 = vld.sshfl [vmem:[#allocation1 + $0x10] sm:$0xff pattern:$0x73625140]
      %632 = vrot.lane.b32.xlu0 %v626, 108
      %v633 = vpop.permute.xlu0 %632
      %634 = vrot.lane.b32.xlu0 %v628, 108
      %v635 = vpop.permute.xlu0 %634
      %636 = vrot.lane.b32.xlu0 %v630, 108
      %v637 = vpop.permute.xlu0 %636
      %vm638 = vcmask 883712
      %v639 = vsel %vm638, %v633, %v635
      %v640 = vsel %vm638, %v635, %v637
      %v642 = vsel %vm294, %v623, 0
      %v645 = vsel %vm298, %v639, 0
      %v648 = vsel %vm298, %v640, 0
      %v651 = vsel %vm298, %v637, 0
      %653 = vmatpush.bf16.msra.mxu0 0
      %654 = vmatpush.bf16.msra.mxu0 0
      %655 = vmatpush.bf16.msra.mxu0 0
      %656 = vmatpush.bf16.msra.mxu0 0
      %657 = vmatpush.bf16.msra.mxu0 0
      %658 = vmatpush.bf16.msra.mxu0 0
      %659 = vmatpush.bf16.msra.mxu0 0
      %660 = vmatpush.bf16.msra.mxu0 %v645
      %661 = vmatmul.bf16.gmra.mxu0 %v642
      %v662 = vpop.f32.mrf.mxu0
      %v663 = vadd.f32 0.0, %v662
      %v664 = vpop.f32.mrf.mxu0
      %665 = vdwg.mxu0
      %666 = vmatpush.bf16.msra.mxu0 0
      %667 = vmatpush.bf16.msra.mxu0 0
      %668 = vmatpush.bf16.msra.mxu0 0
      %669 = vmatpush.bf16.msra.mxu0 0
      %670 = vmatpush.bf16.msra.mxu0 0
      %671 = vmatpush.bf16.msra.mxu0 0
      %672 = vmatpush.bf16.msra.mxu0 0
      %673 = vmatpush.bf16.msra.mxu0 %v648
      %674 = vmatmul.bf16.gmra.mxu0 %v642
      %v675 = vpop.f32.mrf.mxu0
      %v676 = vadd.f32 0.0, %v675
      %v677 = vpop.f32.mrf.mxu0
      %678 = vdwg.mxu0
      %679 = vmatpush.bf16.msra.mxu0 0
      %680 = vmatpush.bf16.msra.mxu0 0
      %681 = vmatpush.bf16.msra.mxu0 0
      %682 = vmatpush.bf16.msra.mxu0 0
      %683 = vmatpush.bf16.msra.mxu0 0
      %684 = vmatpush.bf16.msra.mxu0 0
      %685 = vmatpush.bf16.msra.mxu0 0
      %686 = vmatpush.bf16.msra.mxu0 %v651
      %687 = vmatmul.bf16.gmra.mxu0 %v642
      %v688 = vpop.f32.mrf.mxu0
      %v689 = vadd.f32 0.0, %v688
      %v690 = vpop.f32.mrf.mxu0
      %691 = vdwg.mxu0
      %v692 = vadd.f32 %v618, %v663
      %v693 = vadd.f32 %v619, %v676
      %v694 = vadd.f32 %v620, %v689
      %v695 = vld [vmem:[%s247] sm:$0x3f]
      %s696 = scalar_lea.vmem %s1, 24
      %v697 = vld [vmem:[%s696] sm:$0xf]
      %699 = vst [vmem:[#allocation1] ss:$4 sm:$0xff] %v695
      %v700 = vld.sshfl [vmem:[#allocation1] sm:$0xff pattern:$0x73625140]
      %v702 = vld.sshfl [vmem:[#allocation1 + $0x8] sm:$0xff pattern:$0x73625140]
      %v704 = vld.sshfl [vmem:[#allocation1 + $0x10] sm:$0xff pattern:$0x73625140]
      %706 = vrot.lane.b32.xlu0 %v700, 92
      %v707 = vpop.permute.xlu0 %706
      %708 = vrot.lane.b32.xlu0 %v702, 92
      %v709 = vpop.permute.xlu0 %708
      %710 = vrot.lane.b32.xlu0 %v704, 92
      %v711 = vpop.permute.xlu0 %710
      %vm712 = vcmask 752640
      %v713 = vsel %vm712, %v707, %v709
      %v714 = vsel %vm712, %v709, %v711
      %v716 = vsel %vm294, %v697, 0
      %v719 = vsel %vm298, %v713, 0
      %v722 = vsel %vm298, %v714, 0
      %v725 = vsel %vm298, %v711, 0
      %727 = vmatpush.bf16.msra.mxu0 0
      %728 = vmatpush.bf16.msra.mxu0 0
      %729 = vmatpush.bf16.msra.mxu0 0
      %730 = vmatpush.bf16.msra.mxu0 0
      %731 = vmatpush.bf16.msra.mxu0 0
      %732 = vmatpush.bf16.msra.mxu0 0
      %733 = vmatpush.bf16.msra.mxu0 0
      %734 = vmatpush.bf16.msra.mxu0 %v719
      %735 = vmatmul.bf16.gmra.mxu0 %v716
      %v736 = vpop.f32.mrf.mxu0
      %v737 = vadd.f32 0.0, %v736
      %v738 = vpop.f32.mrf.mxu0
      %739 = vdwg.mxu0
      %740 = vmatpush.bf16.msra.mxu0 0
      %741 = vmatpush.bf16.msra.mxu0 0
      %742 = vmatpush.bf16.msra.mxu0 0
      %743 = vmatpush.bf16.msra.mxu0 0
      %744 = vmatpush.bf16.msra.mxu0 0
      %745 = vmatpush.bf16.msra.mxu0 0
      %746 = vmatpush.bf16.msra.mxu0 0
      %747 = vmatpush.bf16.msra.mxu0 %v722
      %748 = vmatmul.bf16.gmra.mxu0 %v716
      %v749 = vpop.f32.mrf.mxu0
      %v750 = vadd.f32 0.0, %v749
      %v751 = vpop.f32.mrf.mxu0
      %752 = vdwg.mxu0
      %753 = vmatpush.bf16.msra.mxu0 0
      %754 = vmatpush.bf16.msra.mxu0 0
      %755 = vmatpush.bf16.msra.mxu0 0
      %756 = vmatpush.bf16.msra.mxu0 0
      %757 = vmatpush.bf16.msra.mxu0 0
      %758 = vmatpush.bf16.msra.mxu0 0
      %759 = vmatpush.bf16.msra.mxu0 0
      %760 = vmatpush.bf16.msra.mxu0 %v725
      %761 = vmatmul.bf16.gmra.mxu0 %v716
      %v762 = vpop.f32.mrf.mxu0
      %v763 = vadd.f32 0.0, %v762
      %v764 = vpop.f32.mrf.mxu0
      %765 = vdwg.mxu0
      %v766 = vadd.f32 %v692, %v737
      %v767 = vadd.f32 %v693, %v750
      %v768 = vadd.f32 %v694, %v763
      %v769 = vld [vmem:[%s247] sm:$0x3f]
      %s770 = scalar_lea.vmem %s1, 28
      %v771 = vld [vmem:[%s770] sm:$0xf]
      %773 = vst [vmem:[#allocation1] ss:$4 sm:$0xff] %v769
      %v774 = vld.sshfl [vmem:[#allocation1] sm:$0xff pattern:$0x73625140]
      %v776 = vld.sshfl [vmem:[#allocation1 + $0x8] sm:$0xff pattern:$0x73625140]
      %v778 = vld.sshfl [vmem:[#allocation1 + $0x10] sm:$0xff pattern:$0x73625140]
      %780 = vrot.lane.b32.xlu0 %v774, 91
      %v781 = vpop.permute.xlu0 %780
      %782 = vrot.lane.b32.xlu0 %v776, 91
      %v783 = vpop.permute.xlu0 %782
      %784 = vrot.lane.b32.xlu0 %v778, 91
      %v785 = vpop.permute.xlu0 %784
      %vm786 = vcmask 744448
      %v787 = vsel %vm786, %v781, %v783
      %v788 = vsel %vm786, %v783, %v785
      %v790 = vsel %vm294, %v771, 0
      %v793 = vsel %vm298, %v787, 0
      %v796 = vsel %vm298, %v788, 0
      %v799 = vsel %vm298, %v785, 0
      %801 = vmatpush.bf16.msra.mxu0 0
      %802 = vmatpush.bf16.msra.mxu0 0
      %803 = vmatpush.bf16.msra.mxu0 0
      %804 = vmatpush.bf16.msra.mxu0 0
      %805 = vmatpush.bf16.msra.mxu0 0
      %806 = vmatpush.bf16.msra.mxu0 0
      %807 = vmatpush.bf16.msra.mxu0 0
      %808 = vmatpush.bf16.msra.mxu0 %v793
      %809 = vmatmul.bf16.gmra.mxu0 %v790
      %v810 = vpop.f32.mrf.mxu0
      %v811 = vadd.f32 0.0, %v810
      %v812 = vpop.f32.mrf.mxu0
      %813 = vdwg.mxu0
      %814 = vmatpush.bf16.msra.mxu0 0
      %815 = vmatpush.bf16.msra.mxu0 0
      %816 = vmatpush.bf16.msra.mxu0 0
      %817 = vmatpush.bf16.msra.mxu0 0
      %818 = vmatpush.bf16.msra.mxu0 0
      %819 = vmatpush.bf16.msra.mxu0 0
      %820 = vmatpush.bf16.msra.mxu0 0
      %821 = vmatpush.bf16.msra.mxu0 %v796
      %822 = vmatmul.bf16.gmra.mxu0 %v790
      %v823 = vpop.f32.mrf.mxu0
      %v824 = vadd.f32 0.0, %v823
      %v825 = vpop.f32.mrf.mxu0
      %826 = vdwg.mxu0
      %827 = vmatpush.bf16.msra.mxu0 0
      %828 = vmatpush.bf16.msra.mxu0 0
      %829 = vmatpush.bf16.msra.mxu0 0
      %830 = vmatpush.bf16.msra.mxu0 0
      %831 = vmatpush.bf16.msra.mxu0 0
      %832 = vmatpush.bf16.msra.mxu0 0
      %833 = vmatpush.bf16.msra.mxu0 0
      %834 = vmatpush.bf16.msra.mxu0 %v799
      %835 = vmatmul.bf16.gmra.mxu0 %v790
      %v836 = vpop.f32.mrf.mxu0
      %v837 = vadd.f32 0.0, %v836
      %v838 = vpop.f32.mrf.mxu0
      %839 = vdwg.mxu0
      %v840 = vadd.f32 %v766, %v811
      %v841 = vadd.f32 %v767, %v824
      %v842 = vadd.f32 %v768, %v837
      %v843 = vld [vmem:[%s247] sm:$0x3f]
      %s844 = scalar_lea.vmem %s1, 32
      %v845 = vld [vmem:[%s844] sm:$0xf]
      %847 = vst [vmem:[#allocation1] ss:$4 sm:$0xff] %v843
      %v848 = vld.sshfl [vmem:[#allocation1] sm:$0xff pattern:$0x73625140]
      %v850 = vld.sshfl [vmem:[#allocation1 + $0x8] sm:$0xff pattern:$0x73625140]
      %v852 = vld.sshfl [vmem:[#allocation1 + $0x10] sm:$0xff pattern:$0x73625140]
      %854 = vrot.lane.b32.xlu0 %v848, 90
      %v855 = vpop.permute.xlu0 %854
      %856 = vrot.lane.b32.xlu0 %v850, 90
      %v857 = vpop.permute.xlu0 %856
      %858 = vrot.lane.b32.xlu0 %v852, 90
      %v859 = vpop.permute.xlu0 %858
      %vm860 = vcmask 736256
      %v861 = vsel %vm860, %v855, %v857
      %v862 = vsel %vm860, %v857, %v859
      %v864 = vsel %vm294, %v845, 0
      %v867 = vsel %vm298, %v861, 0
      %v870 = vsel %vm298, %v862, 0
      %v873 = vsel %vm298, %v859, 0
      %875 = vmatpush.bf16.msra.mxu0 0
      %876 = vmatpush.bf16.msra.mxu0 0
      %877 = vmatpush.bf16.msra.mxu0 0
      %878 = vmatpush.bf16.msra.mxu0 0
      %879 = vmatpush.bf16.msra.mxu0 0
      %880 = vmatpush.bf16.msra.mxu0 0
      %881 = vmatpush.bf16.msra.mxu0 0
      %882 = vmatpush.bf16.msra.mxu0 %v867
      %883 = vmatmul.bf16.gmra.mxu0 %v864
      %v884 = vpop.f32.mrf.mxu0
      %v885 = vadd.f32 0.0, %v884
      %v886 = vpop.f32.mrf.mxu0
      %887 = vdwg.mxu0
      %888 = vmatpush.bf16.msra.mxu0 0
      %889 = vmatpush.bf16.msra.mxu0 0
      %890 = vmatpush.bf16.msra.mxu0 0
      %891 = vmatpush.bf16.msra.mxu0 0
      %892 = vmatpush.bf16.msra.mxu0 0
      %893 = vmatpush.bf16.msra.mxu0 0
      %894 = vmatpush.bf16.msra.mxu0 0
      %895 = vmatpush.bf16.msra.mxu0 %v870
      %896 = vmatmul.bf16.gmra.mxu0 %v864
      %v897 = vpop.f32.mrf.mxu0
      %v898 = vadd.f32 0.0, %v897
      %v899 = vpop.f32.mrf.mxu0
      %900 = vdwg.mxu0
      %901 = vmatpush.bf16.msra.mxu0 0
      %902 = vmatpush.bf16.msra.mxu0 0
      %903 = vmatpush.bf16.msra.mxu0 0
      %904 = vmatpush.bf16.msra.mxu0 0
      %905 = vmatpush.bf16.msra.mxu0 0
      %906 = vmatpush.bf16.msra.mxu0 0
      %907 = vmatpush.bf16.msra.mxu0 0
      %908 = vmatpush.bf16.msra.mxu0 %v873
      %909 = vmatmul.bf16.gmra.mxu0 %v864
      %v910 = vpop.f32.mrf.mxu0
      %v911 = vadd.f32 0.0, %v910
      %v912 = vpop.f32.mrf.mxu0
      %913 = vdwg.mxu0
      %v914 = vadd.f32 %v840, %v885
      %v915 = vadd.f32 %v841, %v898
      %v916 = vadd.f32 %v842, %v911
      %918 = vrot.lane.b32.xlu0 %v914, 126
      %v919 = vpop.permute.xlu0 %918
      %921 = vrot.lane.b32.xlu0 %v914, 124
      %v922 = vpop.permute.xlu0 %921
      %924 = vrot.lane.b32.xlu0 %v914, 122
      %v925 = vpop.permute.xlu0 %924
      %927 = vrot.lane.b32.xlu0 %v914, 120
      %v928 = vpop.permute.xlu0 %927
      %930 = vrot.lane.b32.xlu0 %v914, 118
      %v931 = vpop.permute.xlu0 %930
      %933 = vrot.lane.b32.xlu0 %v914, 116
      %v934 = vpop.permute.xlu0 %933
      %937 = vrot.lane.b32.xlu0 %v914, 114
      %v938 = vpop.permute.xlu0 %937
      %939 = vrot.lane.b32.xlu0 %v915, 114
      %v940 = vpop.permute.xlu0 %939
      %vm941 = vcmask 932864
      %v942 = vsel %vm941, %v938, %v940
      %944 = vrot.lane.b32.xlu0 %v915, 112
      %v945 = vpop.permute.xlu0 %944
      %947 = vrot.lane.b32.xlu0 %v915, 110
      %v948 = vpop.permute.xlu0 %947
      %950 = vrot.lane.b32.xlu0 %v915, 108
      %v951 = vpop.permute.xlu0 %950
      %953 = vrot.lane.b32.xlu0 %v915, 106
      %v954 = vpop.permute.xlu0 %953
      %956 = vrot.lane.b32.xlu0 %v915, 104
      %v957 = vpop.permute.xlu0 %956
      %959 = vrot.lane.b32.xlu0 %v915, 102
      %v960 = vpop.permute.xlu0 %959
      %963 = vrot.lane.b32.xlu0 %v915, 100
      %v964 = vpop.permute.xlu0 %963
      %965 = vrot.lane.b32.xlu0 %v916, 100
      %v966 = vpop.permute.xlu0 %965
      %vm967 = vcmask 818176
      %v968 = vsel %vm967, %v964, %v966
      %970 = vrot.lane.b32.xlu0 %v916, 98
      %v971 = vpop.permute.xlu0 %970
      %vm973 = vcmask 130048
      %v974 = vsel %vm973, %v914, %v919
      %vm975 = vcmask 261120
      %v976 = vsel %vm975, %v974, %v922
      %vm977 = vcmask 392192
      %v978 = vsel %vm977, %v976, %v925
      %vm979 = vcmask 523264
      %v980 = vsel %vm979, %v978, %v928
      %vm981 = vcmask 654336
      %v982 = vsel %vm981, %v980, %v931
      %vm983 = vcmask 785408
      %v984 = vsel %vm983, %v982, %v934
      %vm985 = vcmask 916480
      %v986 = vsel %vm985, %v984, %v942
      %v987 = vsel %vm973, %v945, %v948
      %v988 = vsel %vm975, %v987, %v951
      %v989 = vsel %vm977, %v988, %v954
      %v990 = vsel %vm979, %v989, %v957
      %v991 = vsel %vm981, %v990, %v960
      %v992 = vsel %vm983, %v991, %v968
      %v993 = vsel %vm985, %v992, %v971
      %v994 = vpack.c.bf16 %v993, %v986
      %995 = vst [vmem:[%s256] sm:$0xff] %v994
      %v996 = vadd.f32 %v986, %v993
      %997 = vadd.xlane.f32.xlu0 %v996
      %v998 = vpop.xlane.xlu0 %997
      %vm999 = vcmask 7168
      %1000 = vst.msk [vmem:[%s264] sm:$0xff] %vm999, %v998
      %v1001 = vmul.f32 %v986, %v986
      %v1002 = vmul.f32 %v993, %v993
      %v1003 = vadd.f32 %v1001, %v1002
      %1004 = vadd.xlane.f32.xlu0 %v1003
      %v1005 = vpop.xlane.xlu0 %1004
      %1006 = vst.msk [vmem:[%s271] sm:$0xff] %vm999, %v1005
      %s1007 = smul.u32 2, %s21
      %p1008 = scmp.lt.s32.totalorder %s20, 1
      %s1009 = scalar_select %p1008, %s20, 1
      %p1010 = scmp.lt.s32.totalorder %s1007, 1
      %s1011 = scalar_select %p1010, %s1007, 1
      %s1012 = smul.addr %s1009, 2
      %s1013 = sadd.s32 %s1011, %s1012
      %s1014 = smul.addr %s1013, 4
      %s1015 = scalar_lea.vmem %s2, %s1014
      %p1016 = scmp.lt.s32.totalorder %s20, 1
      %s1017 = scalar_select %p1016, %s20, 1
      %p1018 = scmp.lt.s32.totalorder %s21, 0
      %s1019 = scalar_select %p1018, %s21, 0
      %s1020 = sadd.s32 %s1019, %s1017
      %s1021 = smul.addr %s1020, 8
      %s1022 = scalar_lea.vmem %s3, %s1021
      %p1023 = scmp.lt.s32.totalorder %s20, 1
      %s1024 = scalar_select %p1023, %s20, 1
      %p1025 = scmp.lt.s32.totalorder %s21, 0
      %s1026 = scalar_select %p1025, %s21, 0
      %s1027 = sadd.s32 %s1026, %s1024
      %s1028 = smul.addr %s1027, 8
      %s1029 = scalar_lea.vmem %s4, %s1028
      // Predicated region
      $region29: #{conv_block_forward.2} parent=27 // pred_check
        %p1030 = pneg %p97
      $region30: #{conv_block_forward.2} parent=27 // pred_check_branch
        %1032 = sbr.rel (%p1030) target = $region32
      $region31: #{conv_block_forward.2} parent=27 // pred_region
        %s1033 = smul.u32 2, %s21
      $region32: #{conv_block_forward.2} parent=27 // pred_fallthru
        _
      // Predicated region
      $region33: #{conv_block_forward.2} parent=27 // pred_check
        %p1034 = pneg %p125
      $region34: #{conv_block_forward.2} parent=27 // pred_check_branch
        %1036 = sbr.rel (%p1034) target = $region36
      $region35: #{conv_block_forward.2} parent=27 // pred_region
        _
      $region36: #{conv_block_forward.2} parent=27 // pred_fallthru
        _
      // Predicated region
      $region37: #{conv_block_forward.2} parent=27 // pred_check
        %p1037 = pneg %p153
      $region38: #{conv_block_forward.2} parent=27 // pred_check_branch
        %1039 = sbr.rel (%p1037) target = $region40
      $region39: #{conv_block_forward.2} parent=27 // pred_region
        _
      $region40: #{conv_block_forward.2} parent=27 // pred_fallthru
        _
    $region28: #{conv_block_forward.2} parent=5 // pred_fallthru
      _
    %p1040 = scmp.le.s32.totalorder 2, %s11
    // Predicated region
    $region41: #{conv_block_forward.2} parent=5 // pred_check
      %p1041 = pneg %p1040
    $region42: #{conv_block_forward.2} parent=5 // pred_check_branch
      %1043 = sbr.rel (%p1041) target = $region44
    $region43: #{conv_block_forward.2} parent=5 // pred_region
      %s1044 = ssub.s32 %s11, 2
      // Predicated region
      $region45: #{conv_block_forward.2} parent=43 // pred_check
        %p1045 = pneg %p103
      $region46: #{conv_block_forward.2} parent=43 // pred_check_branch
        %1047 = sbr.rel (%p1045) target = $region48
      $region47: #{conv_block_forward.2} parent=43 // pred_region
        %s1048 = smul.u32 2, %s23
        %p1049 = scmp.lt.s32.totalorder %s22, 1
        %s1050 = scalar_select %p1049, %s22, 1
        %p1051 = scmp.lt.s32.totalorder %s1048, 1
        %s1052 = scalar_select %p1051, %s1048, 1
        %s1053 = smul.addr %s1050, 2
        %s1054 = sadd.s32 %s1052, %s1053
        %s1055 = smul.addr %s1054, 4
        %s1056 = scalar_lea.vmem %s2, %s1055
      $region48: #{conv_block_forward.2} parent=43 // pred_fallthru
        _
      // Predicated region
      $region49: #{conv_block_forward.2} parent=43 // pred_check
        %p1057 = pneg %p131
      $region50: #{conv_block_forward.2} parent=43 // pred_check_branch
        %1059 = sbr.rel (%p1057) target = $region52
      $region51: #{conv_block_forward.2} parent=43 // pred_region
        %p1060 = scmp.lt.s32.totalorder %s22, 1
        %s1061 = scalar_select %p1060, %s22, 1
        %p1062 = scmp.lt.s32.totalorder %s23, 0
        %s1063 = scalar_select %p1062, %s23, 0
        %s1064 = sadd.s32 %s1063, %s1061
        %s1065 = smul.addr %s1064, 8
        %s1066 = scalar_lea.vmem %s3, %s1065
      $region52: #{conv_block_forward.2} parent=43 // pred_fallthru
        _
      // Predicated region
      $region53: #{conv_block_forward.2} parent=43 // pred_check
        %p1067 = pneg %p159
      $region54: #{conv_block_forward.2} parent=43 // pred_check_branch
        %1069 = sbr.rel (%p1067) target = $region56
      $region55: #{conv_block_forward.2} parent=43 // pred_region
        %p1070 = scmp.lt.s32.totalorder %s22, 1
        %s1071 = scalar_select %p1070, %s22, 1
        %p1072 = scmp.lt.s32.totalorder %s23, 0
        %s1073 = scalar_select %p1072, %s23, 0
        %s1074 = sadd.s32 %s1073, %s1071
        %s1075 = smul.addr %s1074, 8
        %s1076 = scalar_lea.vmem %s4, %s1075
      $region56: #{conv_block_forward.2} parent=43 // pred_fallthru
        _
    $region44: #{conv_block_forward.2} parent=5 // pred_fallthru
      _
  $region6: #{conv_block_forward.2} parent=0 // loop_footer
    %s15 = sadd.s32 1, %s11
  $region7: #{conv_block_forward.2} parent=0 // loop_footer_branch
    %10 = sbr.rel target = $region3
  $region8: #{conv_block_forward.2} parent=0 // loop_exit
    _

</llo_original>
